<compile_context>
chip_gen: v7x
topology: tpu7x:2x2x1
jax: 0.10.0
libtpu: 0.0.40
codegen_flags: <defaults>
</compile_context>

<pallas_src>
import math
from functools import partial

import jax
import jax.numpy as jnp
from jax.experimental import pallas as pl
from jax.experimental.pallas import tpu as pltpu


# ----------------------------------- kernel ----------------------------------

def self_attention_kernel(q_ref, k_ref, v_ref, mask_ref,
                          wq_ref, bq_ref, wk_ref, bk_ref, wv_ref, bv_ref,
                          wp_ref, bp_ref, out_ref, *,
                          n_head, approx_recip=True, use_bf16_matmul=False):
    # Block shapes: activations (1, L, D), mask (1, L, L), weights full.
    L, D = out_ref.shape[1], out_ref.shape[2]
    hd = D // n_head
    scale = 1.0 / math.sqrt(hd)
    mm_dtype = jnp.bfloat16 if use_bf16_matmul else jnp.float32

    xq = q_ref[0]                                   # (L, D)
    xk = k_ref[0]
    xv = v_ref[0]

    def proj(x, w_ref, b_ref):
        return jnp.dot(x.astype(mm_dtype), w_ref[...].astype(mm_dtype),
                       preferred_element_type=jnp.float32) + b_ref[...]

    # QKV projections: single (L, D) x (D, D) MXU matmuls.
    # 1/sqrt(hd) is folded into q instead of scaling every score tile.
    q = proj(xq, wq_ref, bq_ref) * scale            # (L, D) f32
    k = proj(xk, wk_ref, bk_ref)
    v = proj(xv, wv_ref, bv_ref)

    # Split heads with the head axis LEADING (major), so every downstream
    # contraction is a standard leading-batch-dim matmul and no sub-128 lane
    # slicing ever happens.
    qh = jnp.transpose(q.reshape(L, n_head, hd), (1, 0, 2))   # (H, L, hd)
    kh = jnp.transpose(k.reshape(L, n_head, hd), (1, 0, 2))
    vh = jnp.transpose(v.reshape(L, n_head, hd), (1, 0, 2))

    # Additive mask bias, computed once for all heads.  Large finite negative
    # instead of -inf so a fully-masked row yields a uniform distribution
    # rather than NaN.
    bias = jnp.where(mask_ref[0] == 0.0,
                     jnp.float32(-1e30), jnp.float32(0.0))    # (L, L)

    # All heads in one score einsum, one softmax over (H, L, L).
    s = jnp.einsum('hqd,hkd->hqk', qh.astype(mm_dtype), kh.astype(mm_dtype),
                   preferred_element_type=jnp.float32) + bias[None]
    m = jnp.max(s, axis=-1, keepdims=True)
    e = jnp.exp(s - m)
    denom = jnp.sum(e, axis=-1, keepdims=True)
    if approx_recip:
        p = e * pl.reciprocal(denom, approx=True)
    else:
        p = e / denom

    # One batched PV matmul for all heads.
    yh = jnp.einsum('hqk,hkd->hqd', p.astype(mm_dtype), vh.astype(mm_dtype),
                    preferred_element_type=jnp.float32)        # (H, L, hd)

    # Fused output projection, no concatenate:
    #   proj(concat_h(y_h)) == sum_h y_h @ Wp[h*hd:(h+1)*hd, :]
    # wp_ref is pre-reshaped to (H, hd, D) in the wrapper.
    contrib = jnp.einsum('hqd,hdk->hqk', yh.astype(mm_dtype),
                         wp_ref[...].astype(mm_dtype),
                         preferred_element_type=jnp.float32)   # (H, L, D)
    out_ref[0] = jnp.sum(contrib, axis=0) + bp_ref[...]


# ----------------------------------- wrapper ----------------------------------

def self_attention_forward(params, key_x, value_x, query_x, atten_masks, *,
                           n_head, approx_recip=True, use_bf16_matmul=False):
    B, L, D = query_x.shape
    assert D % n_head == 0
    hd = D // n_head

    # Layout plumbing in the wrapper (not the kernel): Wp split per head so the
    # kernel's output projection is a single batched contraction over heads.
    wp3 = params['wp'].reshape(n_head, hd, D)

    args = (query_x, key_x, value_x, atten_masks,
            params['wq'], params['bq'], params['wk'], params['bk'],
            params['wv'], params['bv'], wp3, params['bp'])

    act_spec = pl.BlockSpec((1, L, D), lambda b: (b, 0, 0))
    mask_spec = pl.BlockSpec((1, L, L), lambda b: (b, 0, 0))

    def resident(a):
        # Full block, constant index map -> stays VMEM-resident across steps.
        nd = a.ndim
        return pl.BlockSpec(a.shape, lambda b, nd=nd: (0,) * nd)

    in_specs = ([act_spec, act_spec, act_spec, mask_spec]
                + [resident(a) for a in args[4:]])

    out = pl.pallas_call(
        partial(self_attention_kernel, n_head=n_head,
                approx_recip=approx_recip, use_bf16_matmul=use_bf16_matmul),
        out_shape=jax.ShapeDtypeStruct((B, L, D), jnp.float32),
        grid=(B,),
        in_specs=in_specs,
        out_specs=pl.BlockSpec((1, L, D), lambda b: (b, 0, 0)),
        compiler_params=pltpu.CompilerParams(
            dimension_semantics=("parallel",)),
    )(*args)
    return out


# ----------------------- pure-JAX reference (PyTorch semantics) ---------------

def self_attention_reference(params, key_x, value_x, query_x, atten_masks, *, n_head):
    B, L, D = query_x.shape
    hd = D // n_head
    k = (key_x @ params['wk'] + params['bk']).reshape(B, L, n_head, hd).transpose(0, 2, 1, 3)
    q = (query_x @ params['wq'] + params['bq']).reshape(B, L, n_head, hd).transpose(0, 2, 1, 3)
    v = (value_x @ params['wv'] + params['bv']).reshape(B, L, n_head, hd).transpose(0, 2, 1, 3)
    att = jnp.einsum('bhld,bhmd->bhlm', q, k) * (1.0 / math.sqrt(hd))
    att = jnp.where(atten_masks[:, None] == 0, -jnp.inf, att)
    att = jax.nn.softmax(att, axis=-1)
    y = jnp.einsum('bhlm,bhmd->bhld', att, v).transpose(0, 2, 1, 3).reshape(B, L, D)
    return y @ params['wp'] + params['bp']


# -------------------------------- param init ----------------------------------

def init_params(key, n_embd):
    # Mirrors init_: orthogonal weights (gain 0.01), zero biases.
    # Stored as (in, out) so y = x @ W + b.
    def lin(k, gain=0.01):
        w = jax.nn.initializers.orthogonal(gain)(k, (n_embd, n_embd), jnp.float32)
        b = jnp.zeros((1, n_embd), jnp.float32)
        return w, b

    kq, kk, kv, kp = jax.random.split(key, 4)
    p = {}
    p['wq'], p['bq'] = lin(kq)
    p['wk'], p['bk'] = lin(kk)
    p['wv'], p['bv'] = lin(kv)
    p['wp'], p['bp'] = lin(kp)
    return p


# ------------------------------------ main -------------------------------------

if __name__ == "__main__":
    B, n_agent, n_embd, n_head = 2, 8, 32, 4
    L = n_agent

    root = jax.random.PRNGKey(0)
    kparam, kq, kk, kv, km = jax.random.split(root, 5)
    params = init_params(kparam, n_embd)

    query = jax.random.normal(kq, (B, L, n_embd), jnp.float32)
    key_x = jax.random.normal(kk, (B, L, n_embd), jnp.float32)
    value_x = jax.random.normal(kv, (B, L, n_embd), jnp.float32)

    atten_masks = (jax.random.uniform(km, (B, L, L)) > 0.3).astype(jnp.float32)
    # keep the diagonal unmasked so no row is fully masked (matches module usage)
    atten_masks = jnp.maximum(atten_masks, jnp.eye(L, dtype=jnp.float32)[None])

    out = self_attention_forward(params, key_x, value_x, query, atten_masks,
                                 n_head=n_head)
    out = jax.block_until_ready(out)

    ref = self_attention_reference(params, key_x, value_x, query, atten_masks,
                                   n_head=n_head)
    assert out.shape == (B, L, n_embd) and out.dtype == jnp.float32
    max_err = float(jnp.max(jnp.abs(out - ref)))
    assert jnp.allclose(out, ref, atol=2e-5, rtol=1e-3), max_err

    print("KERNEL_OK")
</pallas_src>

<mosaic_0001>
module attributes {stable_mosaic.version = 11 : i64} {
  func.func @self_attention_kernel(%arg0: i32, %arg1: memref<1x8x32xf32, #tpu.memory_space<vmem>>, %arg2: memref<1x8x32xf32, #tpu.memory_space<vmem>>, %arg3: memref<1x8x32xf32, #tpu.memory_space<vmem>>, %arg4: memref<1x8x8xf32, #tpu.memory_space<vmem>>, %arg5: memref<32x32xf32, #tpu.memory_space<vmem>>, %arg6: memref<1x32xf32, #tpu.memory_space<vmem>>, %arg7: memref<32x32xf32, #tpu.memory_space<vmem>>, %arg8: memref<1x32xf32, #tpu.memory_space<vmem>>, %arg9: memref<32x32xf32, #tpu.memory_space<vmem>>, %arg10: memref<1x32xf32, #tpu.memory_space<vmem>>, %arg11: memref<4x8x32xf32, #tpu.memory_space<vmem>>, %arg12: memref<1x32xf32, #tpu.memory_space<vmem>>, %arg13: memref<1x8x32xf32, #tpu.memory_space<vmem>>) attributes {dimension_semantics = [#tpu.dimension_semantics<parallel>], iteration_bounds = array<i64: 2>, scalar_prefetch = 0 : i64, scratch_operands = 0 : i64, tpu.core_type = #tpu.core_type<tc>, window_params = [{transform_indices = @transform_0, window_bounds = array<i64: 1, 8, 32>}, {transform_indices = @transform_1, window_bounds = array<i64: 1, 8, 32>}, {transform_indices = @transform_2, window_bounds = array<i64: 1, 8, 32>}, {transform_indices = @transform_3, window_bounds = array<i64: 1, 8, 8>}, {pipeline_mode = #tpu.pipeline_mode<synchronous>, transform_indices = @transform_4, window_bounds = array<i64: 32, 32>}, {pipeline_mode = #tpu.pipeline_mode<synchronous>, transform_indices = @transform_5, window_bounds = array<i64: 1, 32>}, {pipeline_mode = #tpu.pipeline_mode<synchronous>, transform_indices = @transform_6, window_bounds = array<i64: 32, 32>}, {pipeline_mode = #tpu.pipeline_mode<synchronous>, transform_indices = @transform_7, window_bounds = array<i64: 1, 32>}, {pipeline_mode = #tpu.pipeline_mode<synchronous>, transform_indices = @transform_8, window_bounds = array<i64: 32, 32>}, {pipeline_mode = #tpu.pipeline_mode<synchronous>, transform_indices = @transform_9, window_bounds = array<i64: 1, 32>}, {pipeline_mode = #tpu.pipeline_mode<synchronous>, transform_indices = @transform_10, window_bounds = array<i64: 4, 8, 32>}, {pipeline_mode = #tpu.pipeline_mode<synchronous>, transform_indices = @transform_11, window_bounds = array<i64: 1, 32>}, {transform_indices = @transform_12, window_bounds = array<i64: 1, 8, 32>}]} {
    %c0 = arith.constant 0 : index
    %c0_0 = arith.constant 0 : index
    %c0_1 = arith.constant 0 : index
    %0 = vector.load %arg1[%c0, %c0_0, %c0_1] : memref<1x8x32xf32, #tpu.memory_space<vmem>>, vector<1x8x32xf32>
    %1 = vector.shape_cast %0 : vector<1x8x32xf32> to vector<8x32xf32>
    %c0_2 = arith.constant 0 : index
    %c0_3 = arith.constant 0 : index
    %c0_4 = arith.constant 0 : index
    %2 = vector.load %arg2[%c0_2, %c0_3, %c0_4] : memref<1x8x32xf32, #tpu.memory_space<vmem>>, vector<1x8x32xf32>
    %3 = vector.shape_cast %2 : vector<1x8x32xf32> to vector<8x32xf32>
    %c0_5 = arith.constant 0 : index
    %c0_6 = arith.constant 0 : index
    %c0_7 = arith.constant 0 : index
    %4 = vector.load %arg3[%c0_5, %c0_6, %c0_7] : memref<1x8x32xf32, #tpu.memory_space<vmem>>, vector<1x8x32xf32>
    %5 = vector.shape_cast %4 : vector<1x8x32xf32> to vector<8x32xf32>
    %c0_8 = arith.constant 0 : index
    %c0_9 = arith.constant 0 : index
    %6 = vector.load %arg5[%c0_8, %c0_9] : memref<32x32xf32, #tpu.memory_space<vmem>>, vector<32x32xf32>
    %cst = arith.constant dense<0.000000e+00> : vector<8x32xf32>
    %7 = tpu.matmul %1, %6, %cst {dimension_numbers = #tpu.dot_dimension_numbers<[1], [0], [0], [1], [0, 0, 1, 1], [], []>} : vector<8x32xf32>, vector<32x32xf32>, vector<8x32xf32> -> vector<8x32xf32>
    %c0_10 = arith.constant 0 : index
    %c0_11 = arith.constant 0 : index
    %8 = vector.load %arg6[%c0_10, %c0_11] : memref<1x32xf32, #tpu.memory_space<vmem>>, vector<1x32xf32>
    %9 = vector.broadcast %8 : vector<1x32xf32> to vector<8x32xf32>
    %10 = arith.addf %7, %9 : vector<8x32xf32>
    %cst_12 = arith.constant 0.353553385 : f32
    %11 = vector.broadcast %cst_12 : f32 to vector<8x32xf32>
    %12 = arith.mulf %10, %11 : vector<8x32xf32>
    %c0_13 = arith.constant 0 : index
    %c0_14 = arith.constant 0 : index
    %13 = vector.load %arg7[%c0_13, %c0_14] : memref<32x32xf32, #tpu.memory_space<vmem>>, vector<32x32xf32>
    %cst_15 = arith.constant dense<0.000000e+00> : vector<8x32xf32>
    %14 = tpu.matmul %3, %13, %cst_15 {dimension_numbers = #tpu.dot_dimension_numbers<[1], [0], [0], [1], [0, 0, 1, 1], [], []>} : vector<8x32xf32>, vector<32x32xf32>, vector<8x32xf32> -> vector<8x32xf32>
    %c0_16 = arith.constant 0 : index
    %c0_17 = arith.constant 0 : index
    %15 = vector.load %arg8[%c0_16, %c0_17] : memref<1x32xf32, #tpu.memory_space<vmem>>, vector<1x32xf32>
    %16 = vector.broadcast %15 : vector<1x32xf32> to vector<8x32xf32>
    %17 = arith.addf %14, %16 : vector<8x32xf32>
    %c0_18 = arith.constant 0 : index
    %c0_19 = arith.constant 0 : index
    %18 = vector.load %arg9[%c0_18, %c0_19] : memref<32x32xf32, #tpu.memory_space<vmem>>, vector<32x32xf32>
    %cst_20 = arith.constant dense<0.000000e+00> : vector<8x32xf32>
    %19 = tpu.matmul %5, %18, %cst_20 {dimension_numbers = #tpu.dot_dimension_numbers<[1], [0], [0], [1], [0, 0, 1, 1], [], []>} : vector<8x32xf32>, vector<32x32xf32>, vector<8x32xf32> -> vector<8x32xf32>
    %c0_21 = arith.constant 0 : index
    %c0_22 = arith.constant 0 : index
    %20 = vector.load %arg10[%c0_21, %c0_22] : memref<1x32xf32, #tpu.memory_space<vmem>>, vector<1x32xf32>
    %21 = vector.broadcast %20 : vector<1x32xf32> to vector<8x32xf32>
    %22 = arith.addf %19, %21 : vector<8x32xf32>
    %23 = vector.shape_cast %12 : vector<8x32xf32> to vector<8x4x8xf32>
    %24 = tpu.transpose %23, [1, 0, 2] : vector<8x4x8xf32> -> vector<4x8x8xf32>
    %25 = vector.shape_cast %17 : vector<8x32xf32> to vector<8x4x8xf32>
    %26 = tpu.transpose %25, [1, 0, 2] : vector<8x4x8xf32> -> vector<4x8x8xf32>
    %27 = vector.shape_cast %22 : vector<8x32xf32> to vector<8x4x8xf32>
    %28 = tpu.transpose %27, [1, 0, 2] : vector<8x4x8xf32> -> vector<4x8x8xf32>
    %c0_23 = arith.constant 0 : index
    %c0_24 = arith.constant 0 : index
    %c0_25 = arith.constant 0 : index
    %29 = vector.load %arg4[%c0_23, %c0_24, %c0_25] : memref<1x8x8xf32, #tpu.memory_space<vmem>>, vector<1x8x8xf32>
    %30 = vector.shape_cast %29 : vector<1x8x8xf32> to vector<8x8xf32>
    %cst_26 = arith.constant 0.000000e+00 : f32
    %31 = vector.broadcast %cst_26 : f32 to vector<8x8xf32>
    %32 = arith.cmpf oeq, %30, %31 : vector<8x8xf32>
    %cst_27 = arith.constant -1.000000e+30 : f32
    %cst_28 = arith.constant 0.000000e+00 : f32
    %33 = vector.broadcast %cst_27 : f32 to vector<8x8xf32>
    %34 = vector.broadcast %cst_28 : f32 to vector<8x8xf32>
    %35 = arith.select %32, %33, %34 : vector<8x8xi1>, vector<8x8xf32>
    "tpu.trace_start"() <{level = 10 : i32, message = "hqd,hkd->hqk"}> : () -> ()
    %cst_29 = arith.constant dense<0.000000e+00> : vector<4x8x8xf32>
    %36 = tpu.matmul %24, %26, %cst_29 {dimension_numbers = #tpu.dot_dimension_numbers<[2], [2], [1], [1], [0, 0, 0, 1, 1, 1], [0], [0]>} : vector<4x8x8xf32>, vector<4x8x8xf32>, vector<4x8x8xf32> -> vector<4x8x8xf32>
    "tpu.trace_stop"() : () -> ()
    %37 = vector.shape_cast %35 : vector<8x8xf32> to vector<1x8x8xf32>
    %38 = vector.broadcast %37 : vector<1x8x8xf32> to vector<4x8x8xf32>
    %39 = arith.addf %36, %38 : vector<4x8x8xf32>
    %cst_30 = arith.constant dense<0xFF800000> : vector<4x8xf32>
    %40 = vector.multi_reduction <maximumf>, %39, %cst_30 [2] : vector<4x8x8xf32> to vector<4x8xf32>
    %41 = vector.shape_cast %40 : vector<4x8xf32> to vector<4x8x1xf32>
    %42 = vector.broadcast %41 : vector<4x8x1xf32> to vector<4x8x8xf32>
    %43 = arith.subf %39, %42 : vector<4x8x8xf32>
    %44 = math.exp %43 : vector<4x8x8xf32>
    %cst_31 = arith.constant dense<0.000000e+00> : vector<4x8xf32>
    %45 = vector.multi_reduction <add>, %44, %cst_31 [2] : vector<4x8x8xf32> to vector<4x8xf32>
    %46 = vector.shape_cast %45 : vector<4x8xf32> to vector<4x8x1xf32>
    %47 = tpu.reciprocal %46 {approx = true} : vector<4x8x1xf32> -> vector<4x8x1xf32>
    %48 = vector.broadcast %47 : vector<4x8x1xf32> to vector<4x8x8xf32>
    %49 = arith.mulf %44, %48 : vector<4x8x8xf32>
    "tpu.trace_start"() <{level = 10 : i32, message = "hqk,hkd->hqd"}> : () -> ()
    %cst_32 = arith.constant dense<0.000000e+00> : vector<4x8x8xf32>
    %50 = tpu.matmul %49, %28, %cst_32 {dimension_numbers = #tpu.dot_dimension_numbers<[2], [1], [1], [2], [0, 0, 0, 1, 1, 2], [0], [0]>} : vector<4x8x8xf32>, vector<4x8x8xf32>, vector<4x8x8xf32> -> vector<4x8x8xf32>
    "tpu.trace_stop"() : () -> ()
    %c0_33 = arith.constant 0 : index
    %c0_34 = arith.constant 0 : index
    %c0_35 = arith.constant 0 : index
    %51 = vector.load %arg11[%c0_33, %c0_34, %c0_35] : memref<4x8x32xf32, #tpu.memory_space<vmem>>, vector<4x8x32xf32>
    "tpu.trace_start"() <{level = 10 : i32, message = "hqd,hdk->hqk"}> : () -> ()
    %cst_36 = arith.constant dense<0.000000e+00> : vector<4x8x32xf32>
    %52 = tpu.matmul %50, %51, %cst_36 {dimension_numbers = #tpu.dot_dimension_numbers<[2], [1], [1], [2], [0, 0, 0, 1, 1, 2], [0], [0]>} : vector<4x8x8xf32>, vector<4x8x32xf32>, vector<4x8x32xf32> -> vector<4x8x32xf32>
    "tpu.trace_stop"() : () -> ()
    %cst_37 = arith.constant dense<0.000000e+00> : vector<8x32xf32>
    %53 = vector.multi_reduction <add>, %52, %cst_37 [0] : vector<4x8x32xf32> to vector<8x32xf32>
    %c0_38 = arith.constant 0 : index
    %c0_39 = arith.constant 0 : index
    %54 = vector.load %arg12[%c0_38, %c0_39] : memref<1x32xf32, #tpu.memory_space<vmem>>, vector<1x32xf32>
    %55 = vector.broadcast %54 : vector<1x32xf32> to vector<8x32xf32>
    %56 = arith.addf %53, %55 : vector<8x32xf32>
    %c0_40 = arith.constant 0 : index
    %c0_41 = arith.constant 0 : index
    %c0_42 = arith.constant 0 : index
    %57 = vector.load %arg13[%c0_40, %c0_41, %c0_42] : memref<1x8x32xf32, #tpu.memory_space<vmem>>, vector<1x8x32xf32>
    %58 = vector.shape_cast %57 : vector<1x8x32xf32> to vector<8x32xf32>
    %59 = vector.shape_cast %56 : vector<8x32xf32> to vector<1x8x32xf32>
    tpu.vector_store %arg13[%c0_40, %c0_41, %c0_42], %59 {strides = array<i32>} : memref<1x8x32xf32, #tpu.memory_space<vmem>>, vector<1x8x32xf32>,
    return
  }
  func.func @transform_0(%arg0: i32) -> (i32, i32, i32) {
    %c0_i32 = arith.constant 0 : i32
    %c0_i32_0 = arith.constant 0 : i32
    %c0_i32_1 = arith.constant 0 : i32
    return %arg0, %c0_i32, %c0_i32_0 : i32, i32, i32
  }
  func.func @transform_1(%arg0: i32) -> (i32, i32, i32) {
    %c0_i32 = arith.constant 0 : i32
    %c0_i32_0 = arith.constant 0 : i32
    %c0_i32_1 = arith.constant 0 : i32
    return %arg0, %c0_i32, %c0_i32_0 : i32, i32, i32
  }
  func.func @transform_2(%arg0: i32) -> (i32, i32, i32) {
    %c0_i32 = arith.constant 0 : i32
    %c0_i32_0 = arith.constant 0 : i32
    %c0_i32_1 = arith.constant 0 : i32
    return %arg0, %c0_i32, %c0_i32_0 : i32, i32, i32
  }
  func.func @transform_3(%arg0: i32) -> (i32, i32, i32) {
    %c0_i32 = arith.constant 0 : i32
    %c0_i32_0 = arith.constant 0 : i32
    %c0_i32_1 = arith.constant 0 : i32
    return %arg0, %c0_i32, %c0_i32_0 : i32, i32, i32
  }
  func.func @transform_4(%arg0: i32) -> (i32, i32) {
    %c0_i32 = arith.constant 0 : i32
    %c0_i32_0 = arith.constant 0 : i32
    %c0_i32_1 = arith.constant 0 : i32
    return %c0_i32, %c0_i32_0 : i32, i32
  }
  func.func @transform_5(%arg0: i32) -> (i32, i32) {
    %c0_i32 = arith.constant 0 : i32
    %c0_i32_0 = arith.constant 0 : i32
    %c0_i32_1 = arith.constant 0 : i32
    return %c0_i32, %c0_i32_0 : i32, i32
  }
  func.func @transform_6(%arg0: i32) -> (i32, i32) {
    %c0_i32 = arith.constant 0 : i32
    %c0_i32_0 = arith.constant 0 : i32
    %c0_i32_1 = arith.constant 0 : i32
    return %c0_i32, %c0_i32_0 : i32, i32
  }
  func.func @transform_7(%arg0: i32) -> (i32, i32) {
    %c0_i32 = arith.constant 0 : i32
    %c0_i32_0 = arith.constant 0 : i32
    %c0_i32_1 = arith.constant 0 : i32
    return %c0_i32, %c0_i32_0 : i32, i32
  }
  func.func @transform_8(%arg0: i32) -> (i32, i32) {
    %c0_i32 = arith.constant 0 : i32
    %c0_i32_0 = arith.constant 0 : i32
    %c0_i32_1 = arith.constant 0 : i32
    return %c0_i32, %c0_i32_0 : i32, i32
  }
  func.func @transform_9(%arg0: i32) -> (i32, i32) {
    %c0_i32 = arith.constant 0 : i32
    %c0_i32_0 = arith.constant 0 : i32
    %c0_i32_1 = arith.constant 0 : i32
    return %c0_i32, %c0_i32_0 : i32, i32
  }
  func.func @transform_10(%arg0: i32) -> (i32, i32, i32) {
    %c0_i32 = arith.constant 0 : i32
    %c0_i32_0 = arith.constant 0 : i32
    %c0_i32_1 = arith.constant 0 : i32
    %c0_i32_2 = arith.constant 0 : i32
    return %c0_i32, %c0_i32_0, %c0_i32_1 : i32, i32, i32
  }
  func.func @transform_11(%arg0: i32) -> (i32, i32) {
    %c0_i32 = arith.constant 0 : i32
    %c0_i32_0 = arith.constant 0 : i32
    %c0_i32_1 = arith.constant 0 : i32
    return %c0_i32, %c0_i32_0 : i32, i32
  }
  func.func @transform_12(%arg0: i32) -> (i32, i32, i32) {
    %c0_i32 = arith.constant 0 : i32
    %c0_i32_0 = arith.constant 0 : i32
    %c0_i32_1 = arith.constant 0 : i32
    return %arg0, %c0_i32, %c0_i32_0 : i32, i32, i32
  }
}

</mosaic_0001>

<llo_original>
// kernel: tpu_custom_call.1
$region0: #{tpu_custom_call.1}
  #allocation0 [shape = 'u32[]', space=smem, size = 0x4, offset = 0x4, fixed_abs, tag = 'smem constant byte address 0x4 - core index']
  #allocation1 [shape = 'u32[144,128]{1,0:T(1,128)}', space=vmem, size = 0x12000, scoped, tag = 'internal scratch']
  %s0 = inlined_call_operand.hbm [shape: f32[2,8,32], index: 0, kind: input, shape index: {}]
  %s1 = inlined_call_operand.hbm [shape: f32[2,8,32], index: 1, kind: input, shape index: {}]
  %s2 = inlined_call_operand.hbm [shape: f32[2,8,32], index: 2, kind: input, shape index: {}]
  %s3 = inlined_call_operand.hbm [shape: f32[2,8,8], index: 3, kind: input, shape index: {}]
  %s4 = inlined_call_operand.hbm [shape: f32[32,32], index: 4, kind: input, shape index: {}]
  %s5 = inlined_call_operand.vmem [shape: f32[1,32], index: 5, kind: input, shape index: {}]
  %s6 = inlined_call_operand.hbm [shape: f32[32,32], index: 6, kind: input, shape index: {}]
  %s7 = inlined_call_operand.vmem [shape: f32[1,32], index: 7, kind: input, shape index: {}]
  %s8 = inlined_call_operand.hbm [shape: f32[32,32], index: 8, kind: input, shape index: {}]
  %s9 = inlined_call_operand.vmem [shape: f32[1,32], index: 9, kind: input, shape index: {}]
  %s10 = inlined_call_operand.vmem [shape: f32[4,8,32], index: 10, kind: input, shape index: {}]
  %s11 = inlined_call_operand.vmem [shape: f32[1,32], index: 11, kind: input, shape index: {}]
  %s12 = inlined_call_operand.hbm [shape: f32[2,8,32], index: 12, kind: output, shape index: {}]
  %s13 = sld [smem:[#allocation0]]
  $region109: #{tpu_custom_call.1} parent=0
    _
  %s15 = ssub.s32 1, %s13
  %s16 = scalar_select 0, %s15, %s13
  $region1: #{tpu_custom_call.1} parent=0
    #allocation2 [shape = 'u8[8192]{0}', space=vmem, size = 0x2000, scoped, tag = 'input window, operand 0']
    #allocation3 [shape = 's32[2]{0}', space=sflag, size = 0x8, scoped, tag = 'scoped memory for tpu_custom_call.1']
    #allocation4 [shape = 's32[2]{0}', space=sflag, size = 0x8, scoped, tag = 'scoped memory for tpu_custom_call.1']
    #allocation5 [shape = 'u8[8192]{0}', space=vmem, size = 0x2000, scoped, tag = 'input window, operand 1']
    #allocation6 [shape = 's32[2]{0}', space=sflag, size = 0x8, scoped, tag = 'scoped memory for tpu_custom_call.1']
    #allocation7 [shape = 'u8[8192]{0}', space=vmem, size = 0x2000, scoped, tag = 'input window, operand 2']
    #allocation8 [shape = 'u8[8192]{0}', space=vmem, size = 0x2000, scoped, tag = 'input window, operand 3']
    #allocation9 [shape = 's32[2]{0}', space=sflag, size = 0x8, scoped, tag = 'scoped memory for tpu_custom_call.1']
    #allocation10 [shape = 'u8[16384]{0}', space=vmem, size = 0x4000, scoped, tag = 'input window, operand 4, single buffered']
    #allocation11 [shape = 'u8[16384]{0}', space=vmem, size = 0x4000, scoped, tag = 'input window, operand 6, single buffered']
    #allocation12 [shape = 's32[1]{0}', space=sflag, size = 0x4, scoped, tag = 'scoped memory for tpu_custom_call.1']
    #allocation13 [shape = 'u8[16384]{0}', space=vmem, size = 0x4000, scoped, tag = 'input window, operand 8, single buffered']
    #allocation14 [shape = 'u8[8192]{0}', space=vmem, size = 0x2000, scoped, tag = 'output window, operand 0']
    %17 = vsyncpa [#allocation3], 0
    %s18 = scalar_lea.sflag [#allocation3], 1
    %19 = vsyncpa %s18, 0
    %20 = vsyncpa [#allocation6], 0
    %s21 = scalar_lea.sflag [#allocation6], 1
    %22 = vsyncpa %s21, 0
    %23 = vsyncpa [#allocation9], 0
    %s24 = scalar_lea.sflag [#allocation9], 1
    %25 = vsyncpa %s24, 0
    %26 = vsyncpa [#allocation12], 0
    %27 = vsyncpa [#allocation4], 0
    %s28 = scalar_lea.sflag [#allocation4], 1
    %29 = vsyncpa %s28, 0
    loop: start=0, step=1, limit=4
    $region2: #{tpu_custom_call.1} parent=1 // loop_pre_header
      _
    $region3: #{tpu_custom_call.1} parent=1 // loop_header
      %s31 = sphi 0, %s35
      %p32 = scmp.ge.s32.totalorder %s31, 4
      %s41 = sphi 0, %s43
      %s44 = sphi 0, %s41
      %s45 = sphi 0, %s44
      %s61 = sphi 0, %s45
      %s67 = sphi 0, %s69
      %s70 = sphi 0, %s67
      %s71 = sphi 0, %s70
      %s87 = sphi 0, %s71
      %s93 = sphi 0, %s95
      %s96 = sphi 0, %s93
      %s97 = sphi 0, %s96
      %s113 = sphi 0, %s97
      %s119 = sphi 0, %s121
      %s122 = sphi 0, %s119
      %s123 = sphi 0, %s122
      %s139 = sphi 0, %s123
      %s143 = sphi 0, %s143
      %s145 = sphi 0, %s143
      %s146 = sphi 0, %s145
      %s160 = sphi 0, %s146
      %s164 = sphi 0, %s164
      %s166 = sphi 0, %s164
      %s167 = sphi 0, %s166
      %s181 = sphi 0, %s167
      %s185 = sphi 0, %s185
      %s187 = sphi 0, %s185
      %s188 = sphi 0, %s187
      %s202 = sphi 0, %s188
      %s206 = sphi 0, %s206
      %s208 = sphi 0, %s206
      %s209 = sphi 0, %s208
      %s223 = sphi 0, %s209
      %s227 = sphi 0, %s227
      %s229 = sphi 0, %s227
      %s230 = sphi 0, %s229
      %s244 = sphi 0, %s230
      %s248 = sphi 0, %s248
      %s250 = sphi 0, %s248
      %s251 = sphi 0, %s250
      %s265 = sphi 0, %s251
      %s269 = sphi 0, %s269
      %s271 = sphi 0, %s269
      %s272 = sphi 0, %s271
      %s286 = sphi 0, %s272
      %s290 = sphi 0, %s290
      %s292 = sphi 0, %s290
      %s293 = sphi 0, %s292
      %s307 = sphi 0, %s293
      %s313 = sphi 0, %s315
      %s316 = sphi 0, %s313
      %s317 = sphi 0, %s316
      %s333 = sphi 0, %s317
    $region4: #{tpu_custom_call.1} parent=1 // loop_header_branch
      %34 = sbr.rel (%p32) target = $region8
    $region5: #{tpu_custom_call.1} parent=1 // loop_body
      %s36 = ssub.s32 %s31, 1
      %s37 = ssub.s32 %s31, 2
      %s38 = sadd.s32 %s31, 1
      %s39 = ssub.s32 %s31, %s38
      %p40 = scmp.eq.s32.totalorder %s39, 0
      %s42 = sadd.s32 %s41, 1
      %s43 = scalar_select %p40, %s41, %s42
      %p46 = pneg %p40
      %p47 = scmp.eq.s32.totalorder %s31, 1
      %p48 = por %p46, %p47
      %p49 = scmp.ne.s32.totalorder %s41, %s44
      %p50 = scmp.eq.s32.totalorder %s31, 0
      %p51 = por %p49, %p50
      %p52 = scmp.ne.s32.totalorder %s41, %s44
      %p53 = scmp.eq.s32.totalorder %s36, 1
      %p54 = por %p52, %p53
      %p55 = scmp.ne.s32.totalorder %s44, %s45
      %p56 = scmp.eq.s32.totalorder %s36, 0
      %p57 = por %p55, %p56
      %p58 = scmp.ne.s32.totalorder %s44, %s45
      %p59 = scmp.eq.s32.totalorder %s37, 1
      %p60 = por %p58, %p59
      %p62 = scmp.ne.s32.totalorder %s45, %s61
      %p63 = scmp.eq.s32.totalorder %s37, 0
      %p64 = por %p62, %p63
      %s65 = ssub.s32 %s31, %s38
      %p66 = scmp.eq.s32.totalorder %s65, 0
      %s68 = sadd.s32 %s67, 1
      %s69 = scalar_select %p66, %s67, %s68
      %p72 = pneg %p66
      %p73 = scmp.eq.s32.totalorder %s31, 1
      %p74 = por %p72, %p73
      %p75 = scmp.ne.s32.totalorder %s67, %s70
      %p76 = scmp.eq.s32.totalorder %s31, 0
      %p77 = por %p75, %p76
      %p78 = scmp.ne.s32.totalorder %s67, %s70
      %p79 = scmp.eq.s32.totalorder %s36, 1
      %p80 = por %p78, %p79
      %p81 = scmp.ne.s32.totalorder %s70, %s71
      %p82 = scmp.eq.s32.totalorder %s36, 0
      %p83 = por %p81, %p82
      %p84 = scmp.ne.s32.totalorder %s70, %s71
      %p85 = scmp.eq.s32.totalorder %s37, 1
      %p86 = por %p84, %p85
      %p88 = scmp.ne.s32.totalorder %s71, %s87
      %p89 = scmp.eq.s32.totalorder %s37, 0
      %p90 = por %p88, %p89
      %s91 = ssub.s32 %s31, %s38
      %p92 = scmp.eq.s32.totalorder %s91, 0
      %s94 = sadd.s32 %s93, 1
      %s95 = scalar_select %p92, %s93, %s94
      %p98 = pneg %p92
      %p99 = scmp.eq.s32.totalorder %s31, 1
      %p100 = por %p98, %p99
      %p101 = scmp.ne.s32.totalorder %s93, %s96
      %p102 = scmp.eq.s32.totalorder %s31, 0
      %p103 = por %p101, %p102
      %p104 = scmp.ne.s32.totalorder %s93, %s96
      %p105 = scmp.eq.s32.totalorder %s36, 1
      %p106 = por %p104, %p105
      %p107 = scmp.ne.s32.totalorder %s96, %s97
      %p108 = scmp.eq.s32.totalorder %s36, 0
      %p109 = por %p107, %p108
      %p110 = scmp.ne.s32.totalorder %s96, %s97
      %p111 = scmp.eq.s32.totalorder %s37, 1
      %p112 = por %p110, %p111
      %p114 = scmp.ne.s32.totalorder %s97, %s113
      %p115 = scmp.eq.s32.totalorder %s37, 0
      %p116 = por %p114, %p115
      %s117 = ssub.s32 %s31, %s38
      %p118 = scmp.eq.s32.totalorder %s117, 0
      %s120 = sadd.s32 %s119, 1
      %s121 = scalar_select %p118, %s119, %s120
      %p124 = pneg %p118
      %p125 = scmp.eq.s32.totalorder %s31, 1
      %p126 = por %p124, %p125
      %p127 = scmp.ne.s32.totalorder %s119, %s122
      %p128 = scmp.eq.s32.totalorder %s31, 0
      %p129 = por %p127, %p128
      %p130 = scmp.ne.s32.totalorder %s119, %s122
      %p131 = scmp.eq.s32.totalorder %s36, 1
      %p132 = por %p130, %p131
      %p133 = scmp.ne.s32.totalorder %s122, %s123
      %p134 = scmp.eq.s32.totalorder %s36, 0
      %p135 = por %p133, %p134
      %p136 = scmp.ne.s32.totalorder %s122, %s123
      %p137 = scmp.eq.s32.totalorder %s37, 1
      %p138 = por %p136, %p137
      %p140 = scmp.ne.s32.totalorder %s123, %s139
      %p141 = scmp.eq.s32.totalorder %s37, 0
      %p142 = por %p140, %p141
      %s144 = sadd.s32 %s143, 1
      %p147 = scmp.eq.s32.totalorder %s31, 1
      %p148 = scmp.ne.s32.totalorder %s143, %s145
      %p149 = scmp.eq.s32.totalorder %s31, 0
      %p150 = por %p148, %p149
      %p151 = scmp.ne.s32.totalorder %s143, %s145
      %p152 = scmp.eq.s32.totalorder %s36, 1
      %p153 = por %p151, %p152
      %p154 = scmp.ne.s32.totalorder %s145, %s146
      %p155 = scmp.eq.s32.totalorder %s36, 0
      %p156 = por %p154, %p155
      %p157 = scmp.ne.s32.totalorder %s145, %s146
      %p158 = scmp.eq.s32.totalorder %s37, 1
      %p159 = por %p157, %p158
      %p161 = scmp.ne.s32.totalorder %s146, %s160
      %p162 = scmp.eq.s32.totalorder %s37, 0
      %p163 = por %p161, %p162
      %s165 = sadd.s32 %s164, 1
      %p168 = scmp.eq.s32.totalorder %s31, 1
      %p169 = scmp.ne.s32.totalorder %s164, %s166
      %p170 = scmp.eq.s32.totalorder %s31, 0
      %p171 = por %p169, %p170
      %p172 = scmp.ne.s32.totalorder %s164, %s166
      %p173 = scmp.eq.s32.totalorder %s36, 1
      %p174 = por %p172, %p173
      %p175 = scmp.ne.s32.totalorder %s166, %s167
      %p176 = scmp.eq.s32.totalorder %s36, 0
      %p177 = por %p175, %p176
      %p178 = scmp.ne.s32.totalorder %s166, %s167
      %p179 = scmp.eq.s32.totalorder %s37, 1
      %p180 = por %p178, %p179
      %p182 = scmp.ne.s32.totalorder %s167, %s181
      %p183 = scmp.eq.s32.totalorder %s37, 0
      %p184 = por %p182, %p183
      %s186 = sadd.s32 %s185, 1
      %p189 = scmp.eq.s32.totalorder %s31, 1
      %p190 = scmp.ne.s32.totalorder %s185, %s187
      %p191 = scmp.eq.s32.totalorder %s31, 0
      %p192 = por %p190, %p191
      %p193 = scmp.ne.s32.totalorder %s185, %s187
      %p194 = scmp.eq.s32.totalorder %s36, 1
      %p195 = por %p193, %p194
      %p196 = scmp.ne.s32.totalorder %s187, %s188
      %p197 = scmp.eq.s32.totalorder %s36, 0
      %p198 = por %p196, %p197
      %p199 = scmp.ne.s32.totalorder %s187, %s188
      %p200 = scmp.eq.s32.totalorder %s37, 1
      %p201 = por %p199, %p200
      %p203 = scmp.ne.s32.totalorder %s188, %s202
      %p204 = scmp.eq.s32.totalorder %s37, 0
      %p205 = por %p203, %p204
      %s207 = sadd.s32 %s206, 1
      %p210 = scmp.eq.s32.totalorder %s31, 1
      %p211 = scmp.ne.s32.totalorder %s206, %s208
      %p212 = scmp.eq.s32.totalorder %s31, 0
      %p213 = por %p211, %p212
      %p214 = scmp.ne.s32.totalorder %s206, %s208
      %p215 = scmp.eq.s32.totalorder %s36, 1
      %p216 = por %p214, %p215
      %p217 = scmp.ne.s32.totalorder %s208, %s209
      %p218 = scmp.eq.s32.totalorder %s36, 0
      %p219 = por %p217, %p218
      %p220 = scmp.ne.s32.totalorder %s208, %s209
      %p221 = scmp.eq.s32.totalorder %s37, 1
      %p222 = por %p220, %p221
      %p224 = scmp.ne.s32.totalorder %s209, %s223
      %p225 = scmp.eq.s32.totalorder %s37, 0
      %p226 = por %p224, %p225
      %s228 = sadd.s32 %s227, 1
      %p231 = scmp.eq.s32.totalorder %s31, 1
      %p232 = scmp.ne.s32.totalorder %s227, %s229
      %p233 = scmp.eq.s32.totalorder %s31, 0
      %p234 = por %p232, %p233
      %p235 = scmp.ne.s32.totalorder %s227, %s229
      %p236 = scmp.eq.s32.totalorder %s36, 1
      %p237 = por %p235, %p236
      %p238 = scmp.ne.s32.totalorder %s229, %s230
      %p239 = scmp.eq.s32.totalorder %s36, 0
      %p240 = por %p238, %p239
      %p241 = scmp.ne.s32.totalorder %s229, %s230
      %p242 = scmp.eq.s32.totalorder %s37, 1
      %p243 = por %p241, %p242
      %p245 = scmp.ne.s32.totalorder %s230, %s244
      %p246 = scmp.eq.s32.totalorder %s37, 0
      %p247 = por %p245, %p246
      %s249 = sadd.s32 %s248, 1
      %p252 = scmp.eq.s32.totalorder %s31, 1
      %p253 = scmp.ne.s32.totalorder %s248, %s250
      %p254 = scmp.eq.s32.totalorder %s31, 0
      %p255 = por %p253, %p254
      %p256 = scmp.ne.s32.totalorder %s248, %s250
      %p257 = scmp.eq.s32.totalorder %s36, 1
      %p258 = por %p256, %p257
      %p259 = scmp.ne.s32.totalorder %s250, %s251
      %p260 = scmp.eq.s32.totalorder %s36, 0
      %p261 = por %p259, %p260
      %p262 = scmp.ne.s32.totalorder %s250, %s251
      %p263 = scmp.eq.s32.totalorder %s37, 1
      %p264 = por %p262, %p263
      %p266 = scmp.ne.s32.totalorder %s251, %s265
      %p267 = scmp.eq.s32.totalorder %s37, 0
      %p268 = por %p266, %p267
      %s270 = sadd.s32 %s269, 1
      %p273 = scmp.eq.s32.totalorder %s31, 1
      %p274 = scmp.ne.s32.totalorder %s269, %s271
      %p275 = scmp.eq.s32.totalorder %s31, 0
      %p276 = por %p274, %p275
      %p277 = scmp.ne.s32.totalorder %s269, %s271
      %p278 = scmp.eq.s32.totalorder %s36, 1
      %p279 = por %p277, %p278
      %p280 = scmp.ne.s32.totalorder %s271, %s272
      %p281 = scmp.eq.s32.totalorder %s36, 0
      %p282 = por %p280, %p281
      %p283 = scmp.ne.s32.totalorder %s271, %s272
      %p284 = scmp.eq.s32.totalorder %s37, 1
      %p285 = por %p283, %p284
      %p287 = scmp.ne.s32.totalorder %s272, %s286
      %p288 = scmp.eq.s32.totalorder %s37, 0
      %p289 = por %p287, %p288
      %s291 = sadd.s32 %s290, 1
      %p294 = scmp.eq.s32.totalorder %s31, 1
      %p295 = scmp.ne.s32.totalorder %s290, %s292
      %p296 = scmp.eq.s32.totalorder %s31, 0
      %p297 = por %p295, %p296
      %p298 = scmp.ne.s32.totalorder %s290, %s292
      %p299 = scmp.eq.s32.totalorder %s36, 1
      %p300 = por %p298, %p299
      %p301 = scmp.ne.s32.totalorder %s292, %s293
      %p302 = scmp.eq.s32.totalorder %s36, 0
      %p303 = por %p301, %p302
      %p304 = scmp.ne.s32.totalorder %s292, %s293
      %p305 = scmp.eq.s32.totalorder %s37, 1
      %p306 = por %p304, %p305
      %p308 = scmp.ne.s32.totalorder %s293, %s307
      %p309 = scmp.eq.s32.totalorder %s37, 0
      %p310 = por %p308, %p309
      %s311 = ssub.s32 %s31, %s38
      %p312 = scmp.eq.s32.totalorder %s311, 0
      %s314 = sadd.s32 %s313, 1
      %s315 = scalar_select %p312, %s313, %s314
      %p318 = pneg %p312
      %p319 = scmp.eq.s32.totalorder %s31, 1
      %p320 = por %p318, %p319
      %p321 = scmp.ne.s32.totalorder %s313, %s316
      %p322 = scmp.eq.s32.totalorder %s31, 0
      %p323 = por %p321, %p322
      %p324 = scmp.ne.s32.totalorder %s313, %s316
      %p325 = scmp.eq.s32.totalorder %s36, 1
      %p326 = por %p324, %p325
      %p327 = scmp.ne.s32.totalorder %s316, %s317
      %p328 = scmp.eq.s32.totalorder %s36, 0
      %p329 = por %p327, %p328
      %p330 = scmp.ne.s32.totalorder %s316, %s317
      %p331 = scmp.eq.s32.totalorder %s37, 1
      %p332 = por %p330, %p331
      %p334 = scmp.ne.s32.totalorder %s317, %s333
      %p335 = scmp.eq.s32.totalorder %s37, 0
      %p336 = por %p334, %p335
      %p337 = scmp.le.s32.totalorder 1, %s31
      %p338 = scmp.lt.s32.totalorder %s31, 3
      %p339 = pnand %p337, %p338
      %p340 = pneg %p339
      // Predicated region
      $region9: #{tpu_custom_call.1} parent=5 // pred_check
        _
      $region10: #{tpu_custom_call.1} parent=5 // pred_check_branch
        %342 = sbr.rel (%p339) target = $region12
      $region11: #{tpu_custom_call.1} parent=5 // pred_region
        %s343 = ssub.s32 %s31, 1
        // Predicated region
        $region13: #{tpu_custom_call.1} parent=11 // pred_check
          %p344 = pneg %p156
        $region14: #{tpu_custom_call.1} parent=11 // pred_check_branch
          %346 = sbr.rel (%p344) target = $region16
        $region15: #{tpu_custom_call.1} parent=11 // pred_region
          %s348 = ssub.s32 512, 512
          %349 = vsyncadd [#allocation9], %s348
          %s350 = sshll.u32 [#allocation10], 4
          %s351 = int_to_ptr.vmem [resolvable:$true] %s350
          %356 = dma.hbm_to_vmem [thread:$0]  %s4, 512, %s351, [#allocation9], 128, 128, 8
        $region16: #{tpu_custom_call.1} parent=11 // pred_fallthru
          _
        // Predicated region
        $region17: #{tpu_custom_call.1} parent=11 // pred_check
          %p357 = pneg %p177
        $region18: #{tpu_custom_call.1} parent=11 // pred_check_branch
          %359 = sbr.rel (%p357) target = $region20
        $region19: #{tpu_custom_call.1} parent=11 // pred_region
          _
        $region20: #{tpu_custom_call.1} parent=11 // pred_fallthru
          _
        // Predicated region
        $region21: #{tpu_custom_call.1} parent=11 // pred_check
          %p360 = pneg %p198
        $region22: #{tpu_custom_call.1} parent=11 // pred_check_branch
          %362 = sbr.rel (%p360) target = $region24
        $region23: #{tpu_custom_call.1} parent=11 // pred_region
          %s364 = ssub.s32 512, 512
          %365 = vsyncadd [#allocation12], %s364
          %s366 = sshll.u32 [#allocation11], 4
          %s367 = int_to_ptr.vmem [resolvable:$true] %s366
          %372 = dma.hbm_to_vmem [thread:$0]  %s6, 512, %s367, [#allocation12], 128, 128, 8
        $region24: #{tpu_custom_call.1} parent=11 // pred_fallthru
          _
        // Predicated region
        $region25: #{tpu_custom_call.1} parent=11 // pred_check
          %p373 = pneg %p219
        $region26: #{tpu_custom_call.1} parent=11 // pred_check_branch
          %375 = sbr.rel (%p373) target = $region28
        $region27: #{tpu_custom_call.1} parent=11 // pred_region
          _
        $region28: #{tpu_custom_call.1} parent=11 // pred_fallthru
          _
        // Predicated region
        $region29: #{tpu_custom_call.1} parent=11 // pred_check
          %p376 = pneg %p240
        $region30: #{tpu_custom_call.1} parent=11 // pred_check_branch
          %378 = sbr.rel (%p376) target = $region32
        $region31: #{tpu_custom_call.1} parent=11 // pred_region
          %s380 = ssub.s32 512, 512
          %381 = vsyncadd [#allocation12], %s380
          %s382 = sshll.u32 [#allocation13], 4
          %s383 = int_to_ptr.vmem [resolvable:$true] %s382
          %388 = dma.hbm_to_vmem [thread:$0]  %s8, 512, %s383, [#allocation12], 128, 128, 8
        $region32: #{tpu_custom_call.1} parent=11 // pred_fallthru
          _
        // Predicated region
        $region33: #{tpu_custom_call.1} parent=11 // pred_check
          %p389 = pneg %p261
        $region34: #{tpu_custom_call.1} parent=11 // pred_check_branch
          %391 = sbr.rel (%p389) target = $region36
        $region35: #{tpu_custom_call.1} parent=11 // pred_region
          _
        $region36: #{tpu_custom_call.1} parent=11 // pred_fallthru
          _
        // Predicated region
        $region37: #{tpu_custom_call.1} parent=11 // pred_check
          %p392 = pneg %p282
        $region38: #{tpu_custom_call.1} parent=11 // pred_check_branch
          %394 = sbr.rel (%p392) target = $region40
        $region39: #{tpu_custom_call.1} parent=11 // pred_region
          _
        $region40: #{tpu_custom_call.1} parent=11 // pred_fallthru
          _
        // Predicated region
        $region41: #{tpu_custom_call.1} parent=11 // pred_check
          %p395 = pneg %p303
        $region42: #{tpu_custom_call.1} parent=11 // pred_check_branch
          %397 = sbr.rel (%p395) target = $region44
        $region43: #{tpu_custom_call.1} parent=11 // pred_region
          _
        $region44: #{tpu_custom_call.1} parent=11 // pred_fallthru
          _
      $region12: #{tpu_custom_call.1} parent=5 // pred_fallthru
        _
      %p398 = scmp.lt.s32.totalorder %s31, 2
      // Predicated region
      $region45: #{tpu_custom_call.1} parent=5 // pred_check
        %p399 = pneg %p398
      $region46: #{tpu_custom_call.1} parent=5 // pred_check_branch
        %401 = sbr.rel (%p399) target = $region48
      $region47: #{tpu_custom_call.1} parent=5 // pred_region
        // Predicated region
        $region49: #{tpu_custom_call.1} parent=47 // pred_check
          %p402 = pneg %p51
        $region50: #{tpu_custom_call.1} parent=47 // pred_check_branch
          %404 = sbr.rel (%p402) target = $region52
        $region51: #{tpu_custom_call.1} parent=47 // pred_region
          %s405 = sand.u32 %s41, 1
          %s406 = scalar_lea.sflag [#allocation3], %s405
          %s407 = sand.u32 %s41, 1
          %s408 = smul.addr %s407, 8
          %s409 = scalar_lea.vmem [#allocation2], %s408
          %s411 = ssub.s32 128, 128
          %412 = vsyncadd %s406, %s411
          %s413 = smul.addr %s31, 128
          %s414 = scalar_lea.hbm %s0, %s413
          %s416 = sshll.u32 %s409, 4
          %s417 = int_to_ptr.vmem [resolvable:$true] %s416
          %419 = dma.hbm_to_vmem [thread:$0]  %s414, 128, %s417, %s406
        $region52: #{tpu_custom_call.1} parent=47 // pred_fallthru
          _
        // Predicated region
        $region53: #{tpu_custom_call.1} parent=47 // pred_check
          %p420 = pneg %p77
        $region54: #{tpu_custom_call.1} parent=47 // pred_check_branch
          %422 = sbr.rel (%p420) target = $region56
        $region55: #{tpu_custom_call.1} parent=47 // pred_region
          %s423 = sand.u32 %s31, 1
          %s424 = scalar_lea.sflag [#allocation6], %s423
          %s425 = sand.u32 %s67, 1
          %s426 = smul.addr %s425, 8
          %s427 = scalar_lea.vmem [#allocation5], %s426
          %s429 = ssub.s32 128, 128
          %430 = vsyncadd %s424, %s429
          %s431 = smul.addr %s31, 128
          %s432 = scalar_lea.hbm %s1, %s431
          %s434 = sshll.u32 %s427, 4
          %s435 = int_to_ptr.vmem [resolvable:$true] %s434
          %437 = dma.hbm_to_vmem [thread:$0]  %s432, 128, %s435, %s424
        $region56: #{tpu_custom_call.1} parent=47 // pred_fallthru
          _
        // Predicated region
        $region57: #{tpu_custom_call.1} parent=47 // pred_check
          %p438 = pneg %p103
        $region58: #{tpu_custom_call.1} parent=47 // pred_check_branch
          %440 = sbr.rel (%p438) target = $region60
        $region59: #{tpu_custom_call.1} parent=47 // pred_region
          %s441 = sand.u32 %s31, 1
          %s442 = scalar_lea.sflag [#allocation6], %s441
          %s443 = sand.u32 %s93, 1
          %s444 = smul.addr %s443, 8
          %s445 = scalar_lea.vmem [#allocation7], %s444
          %s447 = ssub.s32 128, 128
          %448 = vsyncadd %s442, %s447
          %s449 = smul.addr %s31, 128
          %s450 = scalar_lea.hbm %s2, %s449
          %s452 = sshll.u32 %s445, 4
          %s453 = int_to_ptr.vmem [resolvable:$true] %s452
          %455 = dma.hbm_to_vmem [thread:$0]  %s450, 128, %s453, %s442
        $region60: #{tpu_custom_call.1} parent=47 // pred_fallthru
          _
        // Predicated region
        $region61: #{tpu_custom_call.1} parent=47 // pred_check
          %p456 = pneg %p129
        $region62: #{tpu_custom_call.1} parent=47 // pred_check_branch
          %458 = sbr.rel (%p456) target = $region64
        $region63: #{tpu_custom_call.1} parent=47 // pred_region
          %s459 = sand.u32 %s31, 1
          %s460 = scalar_lea.sflag [#allocation9], %s459
          %s461 = sand.u32 %s119, 1
          %s462 = smul.addr %s461, 8
          %s463 = scalar_lea.vmem [#allocation8], %s462
          %s465 = ssub.s32 128, 128
          %466 = vsyncadd %s460, %s465
          %s467 = smul.addr %s31, 128
          %s468 = scalar_lea.hbm %s3, %s467
          %s470 = sshll.u32 %s463, 4
          %s471 = int_to_ptr.vmem [resolvable:$true] %s470
          %473 = dma.hbm_to_vmem [thread:$0]  %s468, 128, %s471, %s460
        $region64: #{tpu_custom_call.1} parent=47 // pred_fallthru
          _
      $region48: #{tpu_custom_call.1} parent=5 // pred_fallthru
        _
      %p474 = scmp.le.s32.totalorder 1, %s31
      %p475 = scmp.lt.s32.totalorder %s31, 3
      %p476 = pnand %p474, %p475
      %p477 = pneg %p476
      // Predicated region
      $region65: #{tpu_custom_call.1} parent=5 // pred_check
        _
      $region66: #{tpu_custom_call.1} parent=5 // pred_check_branch
        %479 = sbr.rel (%p476) target = $region68
      $region67: #{tpu_custom_call.1} parent=5 // pred_region
        %s480 = ssub.s32 %s31, 1
        %s481 = sand.u32 %s44, 1
        %s482 = scalar_lea.sflag [#allocation3], %s481
        %s483 = sand.u32 %s44, 1
        %s484 = smul.addr %s483, 8
        %s485 = scalar_lea.vmem [#allocation2], %s484
        // Predicated region
        $region69: #{tpu_custom_call.1} parent=67 // pred_check
          %p486 = pneg %p57
        $region70: #{tpu_custom_call.1} parent=67 // pred_check_branch
          %488 = sbr.rel (%p486) target = $region72
        $region71: #{tpu_custom_call.1} parent=67 // pred_region
          %489 = dma.done %s482, 128
        $region72: #{tpu_custom_call.1} parent=67 // pred_fallthru
          _
        %s490 = sand.u32 %s36, 1
        %s491 = scalar_lea.sflag [#allocation6], %s490
        %s492 = sand.u32 %s70, 1
        %s493 = smul.addr %s492, 8
        %s494 = scalar_lea.vmem [#allocation5], %s493
        // Predicated region
        $region73: #{tpu_custom_call.1} parent=67 // pred_check
          %p495 = pneg %p83
        $region74: #{tpu_custom_call.1} parent=67 // pred_check_branch
          %497 = sbr.rel (%p495) target = $region76
        $region75: #{tpu_custom_call.1} parent=67 // pred_region
          %498 = dma.done %s491, 128
        $region76: #{tpu_custom_call.1} parent=67 // pred_fallthru
          _
        %s499 = sand.u32 %s36, 1
        %s500 = scalar_lea.sflag [#allocation6], %s499
        %s501 = sand.u32 %s96, 1
        %s502 = smul.addr %s501, 8
        %s503 = scalar_lea.vmem [#allocation7], %s502
        // Predicated region
        $region77: #{tpu_custom_call.1} parent=67 // pred_check
          %p504 = pneg %p109
        $region78: #{tpu_custom_call.1} parent=67 // pred_check_branch
          %506 = sbr.rel (%p504) target = $region80
        $region79: #{tpu_custom_call.1} parent=67 // pred_region
          %507 = dma.done %s500, 128
        $region80: #{tpu_custom_call.1} parent=67 // pred_fallthru
          _
        %s508 = sand.u32 %s36, 1
        %s509 = scalar_lea.sflag [#allocation9], %s508
        %s510 = sand.u32 %s122, 1
        %s511 = smul.addr %s510, 8
        %s512 = scalar_lea.vmem [#allocation8], %s511
        // Predicated region
        $region81: #{tpu_custom_call.1} parent=67 // pred_check
          %p513 = pneg %p135
        $region82: #{tpu_custom_call.1} parent=67 // pred_check_branch
          %515 = sbr.rel (%p513) target = $region84
        $region83: #{tpu_custom_call.1} parent=67 // pred_region
          %516 = dma.done %s509, 128
        $region84: #{tpu_custom_call.1} parent=67 // pred_fallthru
          _
        // Predicated region
        $region85: #{tpu_custom_call.1} parent=67 // pred_check
          %p517 = pneg %p156
        $region86: #{tpu_custom_call.1} parent=67 // pred_check_branch
          %519 = sbr.rel (%p517) target = $region88
        $region87: #{tpu_custom_call.1} parent=67 // pred_region
          %520 = dma.done [#allocation9], 512
        $region88: #{tpu_custom_call.1} parent=67 // pred_fallthru
          _
        // Predicated region
        $region89: #{tpu_custom_call.1} parent=67 // pred_check
          %p521 = pneg %p198
        $region90: #{tpu_custom_call.1} parent=67 // pred_check_branch
          %523 = sbr.rel (%p521) target = $region92
        $region91: #{tpu_custom_call.1} parent=67 // pred_region
          %524 = dma.done [#allocation12], 512
        $region92: #{tpu_custom_call.1} parent=67 // pred_fallthru
          _
        // Predicated region
        $region93: #{tpu_custom_call.1} parent=67 // pred_check
          %p525 = pneg %p240
        $region94: #{tpu_custom_call.1} parent=67 // pred_check_branch
          %527 = sbr.rel (%p525) target = $region96
        $region95: #{tpu_custom_call.1} parent=67 // pred_region
          %528 = dma.done [#allocation12], 512
        $region96: #{tpu_custom_call.1} parent=67 // pred_fallthru
          _
        %s529 = sand.u32 %s44, 1
        %s530 = scalar_lea.sflag [#allocation3], %s529
        %s531 = sand.u32 %s44, 1
        %s532 = smul.addr %s531, 8
        %s533 = scalar_lea.vmem [#allocation2], %s532
        %p534 = pneg %p57
        %p535 = pneg %p54
        %s536 = sand.u32 %s36, 1
        %s537 = scalar_lea.sflag [#allocation6], %s536
        %s538 = sand.u32 %s70, 1
        %s539 = smul.addr %s538, 8
        %s540 = scalar_lea.vmem [#allocation5], %s539
        %p541 = pneg %p83
        %p542 = pneg %p80
        %s543 = sand.u32 %s36, 1
        %s544 = scalar_lea.sflag [#allocation6], %s543
        %s545 = sand.u32 %s96, 1
        %s546 = smul.addr %s545, 8
        %s547 = scalar_lea.vmem [#allocation7], %s546
        %p548 = pneg %p109
        %p549 = pneg %p106
        %s550 = sand.u32 %s36, 1
        %s551 = scalar_lea.sflag [#allocation9], %s550
        %s552 = sand.u32 %s122, 1
        %s553 = smul.addr %s552, 8
        %s554 = scalar_lea.vmem [#allocation8], %s553
        %p555 = pneg %p135
        %p556 = pneg %p132
        %p557 = pneg %p156
        %p558 = pneg %p153
        %p559 = pneg %p177
        %p560 = pneg %p174
        %p561 = pneg %p198
        %p562 = pneg %p195
        %p563 = pneg %p219
        %p564 = pneg %p216
        %p565 = pneg %p240
        %p566 = pneg %p237
        %p567 = pneg %p261
        %p568 = pneg %p258
        %p569 = pneg %p282
        %p570 = pneg %p279
        %p571 = pneg %p303
        %p572 = pneg %p300
        %p573 = pneg %p329
        %p574 = pneg %p326
        %s575 = sand.u32 %s316, 1
        %s576 = scalar_lea.sflag [#allocation4], %s575
        %s577 = sand.u32 %s316, 1
        %s578 = smul.addr %s577, 8
        %s579 = scalar_lea.vmem [#allocation14], %s578
        %v580 = vld [vmem:[%s485] sm:$0xff]
        %v581 = vld [vmem:[%s494] sm:$0xff]
        %v582 = vld [vmem:[%s503] sm:$0xff]
        %v583 = vld [vmem:[#allocation10] sm:$0xff]
        %v584 = vld [vmem:[#allocation10 + $0x8] sm:$0xff]
        %v585 = vld [vmem:[#allocation10 + $0x10] sm:$0xff]
        %v586 = vld [vmem:[#allocation10 + $0x18] sm:$0xff]
        %v587 = vld [vmem:[%s5] sm:$0x1]
        %v589 = vlaneseq
        %v590 = vshrl.u32 %v589, 7
        %v591 = vsub.s32 0, %v590
        %v592 = vrot.slane %v587, %v591
        %vm594 = vcmask 261120
        %v596 = vsel %vm594, %v580, 0
        %598 = vmatprep.subr.mxu0 0.0
        %599 = vmatpush1.msra.mxu0 %v583
        %600 = vmatprep.subr.mxu0 0.0
        %601 = vmatpush1.msra.mxu0 %v584
        %602 = vmatprep.subr.mxu0 0.0
        %603 = vmatpush1.msra.mxu0 %v585
        %604 = vmatprep.subr.mxu0 0.0
        %605 = vmatpush1.msra.mxu0 %v586
        %606 = vmatprep.subr.mxu0 0.0
        %607 = vmatpush1.msra.mxu0 0.0
        %608 = vmatprep.subr.mxu0 0.0
        %609 = vmatpush1.msra.mxu0 0.0
        %610 = vmatprep.subr.mxu0 0.0
        %611 = vmatpush1.msra.mxu0 0.0
        %612 = vmatprep.subr.mxu0 0.0
        %613 = vmatpush1.msra.mxu0 0.0
        %614 = vmatprep.subr.mxu0 0.0
        %615 = vmatpush1.msra.mxu0 0.0
        %616 = vmatprep.subr.mxu0 0.0
        %617 = vmatpush1.msra.mxu0 0.0
        %618 = vmatprep.subr.mxu0 0.0
        %619 = vmatpush1.msra.mxu0 0.0
        %620 = vmatprep.subr.mxu0 0.0
        %621 = vmatpush1.msra.mxu0 0.0
        %622 = vmatprep.subr.mxu0 0.0
        %623 = vmatpush1.msra.mxu0 0.0
        %624 = vmatprep.subr.mxu0 0.0
        %625 = vmatpush1.msra.mxu0 0.0
        %626 = vmatprep.subr.mxu0 0.0
        %627 = vmatpush1.msra.mxu0 0.0
        %628 = vmatprep.subr.mxu0 0.0
        %629 = vmatpush1.msra.mxu0 0.0
        %630 = vmatprep.subr.mxu0 0.0
        %631 = vmatpush1.msra.mxu0 0.0
        %632 = vmatprep.subr.mxu0 0.0
        %633 = vmatpush1.msra.mxu0 0.0
        %634 = vmatprep.subr.mxu0 0.0
        %635 = vmatpush1.msra.mxu0 0.0
        %636 = vmatprep.subr.mxu0 0.0
        %637 = vmatpush1.msra.mxu0 0.0
        %638 = vmatprep.subr.mxu0 0.0
        %639 = vmatpush1.msra.mxu0 0.0
        %640 = vmatprep.subr.mxu0 0.0
        %641 = vmatpush1.msra.mxu0 0.0
        %642 = vmatprep.subr.mxu0 0.0
        %643 = vmatpush1.msra.mxu0 0.0
        %644 = vmatprep.subr.mxu0 0.0
        %645 = vmatpush1.msra.mxu0 0.0
        %646 = vmatprep.subr.mxu0 0.0
        %647 = vmatpush1.msra.mxu0 0.0
        %648 = vmatprep.subr.mxu0 0.0
        %649 = vmatpush1.msra.mxu0 0.0
        %650 = vmatprep.subr.mxu0 0.0
        %651 = vmatpush1.msra.mxu0 0.0
        %652 = vmatprep.subr.mxu0 0.0
        %653 = vmatpush1.msra.mxu0 0.0
        %654 = vmatprep.subr.mxu0 0.0
        %655 = vmatpush1.msra.mxu0 0.0
        %656 = vmatprep.subr.mxu0 0.0
        %657 = vmatpush1.msra.mxu0 0.0
        %658 = vmatprep.subr.mxu0 0.0
        %659 = vmatpush1.msra.mxu0 0.0
        %660 = vmatprep.subr.mxu0 0.0
        %661 = vmatpush1.msra.mxu0 0.0
        %662 = vmatprep.mubr.f32.mxu0 0.0
        %663 = vmatmul.mubr.f32.gmra.mrb[0].mxu0 %v596
        %v664 = vpop.f32.mrb[0].mxu0
        %v665 = vadd.f32 %v592, %v664
        %v666 = vpop.f32.mrb[0].mxu0
        %667 = vdwg.mxu0
        %v668 = vmul.f32 %v665, 0.35355338
        %v669 = vld [vmem:[#allocation11] sm:$0xff]
        %v670 = vld [vmem:[#allocation11 + $0x8] sm:$0xff]
        %v671 = vld [vmem:[#allocation11 + $0x10] sm:$0xff]
        %v672 = vld [vmem:[#allocation11 + $0x18] sm:$0xff]
        %v673 = vld [vmem:[%s7] sm:$0x1]
        %v675 = vlaneseq
        %v676 = vshrl.u32 %v675, 7
        %v677 = vsub.s32 0, %v676
        %v678 = vrot.slane %v673, %v677
        %v681 = vsel %vm594, %v581, 0
        %683 = vmatprep.subr.mxu0 0.0
        %684 = vmatpush1.msra.mxu0 %v669
        %685 = vmatprep.subr.mxu0 0.0
        %686 = vmatpush1.msra.mxu0 %v670
        %687 = vmatprep.subr.mxu0 0.0
        %688 = vmatpush1.msra.mxu0 %v671
        %689 = vmatprep.subr.mxu0 0.0
        %690 = vmatpush1.msra.mxu0 %v672
        %691 = vmatprep.subr.mxu0 0.0
        %692 = vmatpush1.msra.mxu0 0.0
        %693 = vmatprep.subr.mxu0 0.0
        %694 = vmatpush1.msra.mxu0 0.0
        %695 = vmatprep.subr.mxu0 0.0
        %696 = vmatpush1.msra.mxu0 0.0
        %697 = vmatprep.subr.mxu0 0.0
        %698 = vmatpush1.msra.mxu0 0.0
        %699 = vmatprep.subr.mxu0 0.0
        %700 = vmatpush1.msra.mxu0 0.0
        %701 = vmatprep.subr.mxu0 0.0
        %702 = vmatpush1.msra.mxu0 0.0
        %703 = vmatprep.subr.mxu0 0.0
        %704 = vmatpush1.msra.mxu0 0.0
        %705 = vmatprep.subr.mxu0 0.0
        %706 = vmatpush1.msra.mxu0 0.0
        %707 = vmatprep.subr.mxu0 0.0
        %708 = vmatpush1.msra.mxu0 0.0
        %709 = vmatprep.subr.mxu0 0.0
        %710 = vmatpush1.msra.mxu0 0.0
        %711 = vmatprep.subr.mxu0 0.0
        %712 = vmatpush1.msra.mxu0 0.0
        %713 = vmatprep.subr.mxu0 0.0
        %714 = vmatpush1.msra.mxu0 0.0
        %715 = vmatprep.subr.mxu0 0.0
        %716 = vmatpush1.msra.mxu0 0.0
        %717 = vmatprep.subr.mxu0 0.0
        %718 = vmatpush1.msra.mxu0 0.0
        %719 = vmatprep.subr.mxu0 0.0
        %720 = vmatpush1.msra.mxu0 0.0
        %721 = vmatprep.subr.mxu0 0.0
        %722 = vmatpush1.msra.mxu0 0.0
        %723 = vmatprep.subr.mxu0 0.0
        %724 = vmatpush1.msra.mxu0 0.0
        %725 = vmatprep.subr.mxu0 0.0
        %726 = vmatpush1.msra.mxu0 0.0
        %727 = vmatprep.subr.mxu0 0.0
        %728 = vmatpush1.msra.mxu0 0.0
        %729 = vmatprep.subr.mxu0 0.0
        %730 = vmatpush1.msra.mxu0 0.0
        %731 = vmatprep.subr.mxu0 0.0
        %732 = vmatpush1.msra.mxu0 0.0
        %733 = vmatprep.subr.mxu0 0.0
        %734 = vmatpush1.msra.mxu0 0.0
        %735 = vmatprep.subr.mxu0 0.0
        %736 = vmatpush1.msra.mxu0 0.0
        %737 = vmatprep.subr.mxu0 0.0
        %738 = vmatpush1.msra.mxu0 0.0
        %739 = vmatprep.subr.mxu0 0.0
        %740 = vmatpush1.msra.mxu0 0.0
        %741 = vmatprep.subr.mxu0 0.0
        %742 = vmatpush1.msra.mxu0 0.0
        %743 = vmatprep.subr.mxu0 0.0
        %744 = vmatpush1.msra.mxu0 0.0
        %745 = vmatprep.subr.mxu0 0.0
        %746 = vmatpush1.msra.mxu0 0.0
        %747 = vmatprep.mubr.f32.mxu0 0.0
        %748 = vmatmul.mubr.f32.gmra.mrb[0].mxu0 %v681
        %v749 = vpop.f32.mrb[0].mxu0
        %v750 = vadd.f32 %v678, %v749
        %v751 = vpop.f32.mrb[0].mxu0
        %752 = vdwg.mxu0
        %v753 = vld [vmem:[#allocation13] sm:$0xff]
        %v754 = vld [vmem:[#allocation13 + $0x8] sm:$0xff]
        %v755 = vld [vmem:[#allocation13 + $0x10] sm:$0xff]
        %v756 = vld [vmem:[#allocation13 + $0x18] sm:$0xff]
        %v757 = vld [vmem:[%s9] sm:$0x1]
        %v759 = vlaneseq
        %v760 = vshrl.u32 %v759, 7
        %v761 = vsub.s32 0, %v760
        %v762 = vrot.slane %v757, %v761
        %v765 = vsel %vm594, %v582, 0
        %767 = vmatprep.subr.mxu0 0.0
        %768 = vmatpush1.msra.mxu0 %v753
        %769 = vmatprep.subr.mxu0 0.0
        %770 = vmatpush1.msra.mxu0 %v754
        %771 = vmatprep.subr.mxu0 0.0
        %772 = vmatpush1.msra.mxu0 %v755
        %773 = vmatprep.subr.mxu0 0.0
        %774 = vmatpush1.msra.mxu0 %v756
        %775 = vmatprep.subr.mxu0 0.0
        %776 = vmatpush1.msra.mxu0 0.0
        %777 = vmatprep.subr.mxu0 0.0
        %778 = vmatpush1.msra.mxu0 0.0
        %779 = vmatprep.subr.mxu0 0.0
        %780 = vmatpush1.msra.mxu0 0.0
        %781 = vmatprep.subr.mxu0 0.0
        %782 = vmatpush1.msra.mxu0 0.0
        %783 = vmatprep.subr.mxu0 0.0
        %784 = vmatpush1.msra.mxu0 0.0
        %785 = vmatprep.subr.mxu0 0.0
        %786 = vmatpush1.msra.mxu0 0.0
        %787 = vmatprep.subr.mxu0 0.0
        %788 = vmatpush1.msra.mxu0 0.0
        %789 = vmatprep.subr.mxu0 0.0
        %790 = vmatpush1.msra.mxu0 0.0
        %791 = vmatprep.subr.mxu0 0.0
        %792 = vmatpush1.msra.mxu0 0.0
        %793 = vmatprep.subr.mxu0 0.0
        %794 = vmatpush1.msra.mxu0 0.0
        %795 = vmatprep.subr.mxu0 0.0
        %796 = vmatpush1.msra.mxu0 0.0
        %797 = vmatprep.subr.mxu0 0.0
        %798 = vmatpush1.msra.mxu0 0.0
        %799 = vmatprep.subr.mxu0 0.0
        %800 = vmatpush1.msra.mxu0 0.0
        %801 = vmatprep.subr.mxu0 0.0
        %802 = vmatpush1.msra.mxu0 0.0
        %803 = vmatprep.subr.mxu0 0.0
        %804 = vmatpush1.msra.mxu0 0.0
        %805 = vmatprep.subr.mxu0 0.0
        %806 = vmatpush1.msra.mxu0 0.0
        %807 = vmatprep.subr.mxu0 0.0
        %808 = vmatpush1.msra.mxu0 0.0
        %809 = vmatprep.subr.mxu0 0.0
        %810 = vmatpush1.msra.mxu0 0.0
        %811 = vmatprep.subr.mxu0 0.0
        %812 = vmatpush1.msra.mxu0 0.0
        %813 = vmatprep.subr.mxu0 0.0
        %814 = vmatpush1.msra.mxu0 0.0
        %815 = vmatprep.subr.mxu0 0.0
        %816 = vmatpush1.msra.mxu0 0.0
        %817 = vmatprep.subr.mxu0 0.0
        %818 = vmatpush1.msra.mxu0 0.0
        %819 = vmatprep.subr.mxu0 0.0
        %820 = vmatpush1.msra.mxu0 0.0
        %821 = vmatprep.subr.mxu0 0.0
        %822 = vmatpush1.msra.mxu0 0.0
        %823 = vmatprep.subr.mxu0 0.0
        %824 = vmatpush1.msra.mxu0 0.0
        %825 = vmatprep.subr.mxu0 0.0
        %826 = vmatpush1.msra.mxu0 0.0
        %827 = vmatprep.subr.mxu0 0.0
        %828 = vmatpush1.msra.mxu0 0.0
        %829 = vmatprep.subr.mxu0 0.0
        %830 = vmatpush1.msra.mxu0 0.0
        %831 = vmatprep.mubr.f32.mxu0 0.0
        %832 = vmatmul.mubr.f32.gmra.mrb[0].mxu0 %v765
        %v833 = vpop.f32.mrb[0].mxu0
        %v834 = vadd.f32 %v762, %v833
        %v835 = vpop.f32.mrb[0].mxu0
        %836 = vdwg.mxu0
        %838 = vrot.lane.b32.xlu0 %v668, 120
        %v839 = vpop.permute.xlu0 %838
        %841 = vrot.lane.b32.xlu0 %v668, 112
        %v842 = vpop.permute.xlu0 %841
        %844 = vrot.lane.b32.xlu0 %v668, 104
        %v845 = vpop.permute.xlu0 %844
        %v847 = vcombine.low %v668, %v842
        %v848 = vcombine.high %v668, %v842
        %v850 = vunpack.c.l.s4 1983009808
        %v851 = vunpack.c.0.s8 %v850
        %v852 = vlaneseq
        %v853 = vshrl.u32 %v852, 7
        %v854 = vsub.s32 %v851, %v853
        %v855 = vrot.slane %v847, %v854
        %v857 = vunpack.c.l.s4 1983009808
        %v858 = vunpack.c.0.s8 %v857
        %v859 = vlaneseq
        %v860 = vshrl.u32 %v859, 7
        %v861 = vsub.s32 %v858, %v860
        %v862 = vrot.slane %v848, %v861
        %v863 = vcombine.low %v839, %v845
        %v864 = vcombine.high %v839, %v845
        %v866 = vunpack.c.l.s4 1983009808
        %v867 = vunpack.c.0.s8 %v866
        %v868 = vlaneseq
        %v869 = vshrl.u32 %v868, 7
        %v870 = vsub.s32 %v867, %v869
        %v871 = vrot.slane %v863, %v870
        %v873 = vunpack.c.l.s4 1983009808
        %v874 = vunpack.c.0.s8 %v873
        %v875 = vlaneseq
        %v876 = vshrl.u32 %v875, 7
        %v877 = vsub.s32 %v874, %v876
        %v878 = vrot.slane %v864, %v877
        %v879 = vcombine.low %v855, %v871
        %v880 = vcombine.high %v855, %v871
        %v882 = vunpack.c.l.s4 1934713408
        %v883 = vunpack.c.0.s8 %v882
        %v884 = vlaneseq
        %v885 = vshrl.u32 %v884, 7
        %v886 = vsub.s32 %v883, %v885
        %v887 = vrot.slane %v879, %v886
        %v889 = vunpack.c.l.s4 1934713408
        %v890 = vunpack.c.0.s8 %v889
        %v891 = vlaneseq
        %v892 = vshrl.u32 %v891, 7
        %v893 = vsub.s32 %v890, %v892
        %v894 = vrot.slane %v880, %v893
        %v895 = vcombine.low %v862, %v878
        %v896 = vcombine.high %v862, %v878
        %v898 = vunpack.c.l.s4 1934713408
        %v899 = vunpack.c.0.s8 %v898
        %v900 = vlaneseq
        %v901 = vshrl.u32 %v900, 7
        %v902 = vsub.s32 %v899, %v901
        %v903 = vrot.slane %v895, %v902
        %v905 = vunpack.c.l.s4 1934713408
        %v906 = vunpack.c.0.s8 %v905
        %v907 = vlaneseq
        %v908 = vshrl.u32 %v907, 7
        %v909 = vsub.s32 %v906, %v908
        %v910 = vrot.slane %v896, %v909
        %v911 = vcombine.high %v887, 0.0
        %v912 = vcombine.high %v894, 0.0
        %v913 = vcombine.high %v903, 0.0
        %v914 = vcombine.high %v910, 0.0
        %v915 = vcombine.low %v887, %v894
        %v917 = vunpack.c.l.s4 1983009808
        %v918 = vunpack.c.0.s8 %v917
        %v919 = vlaneseq
        %v920 = vshrl.u32 %v919, 7
        %v921 = vsub.s32 %v918, %v920
        %v922 = vrot.slane %v915, %v921
        %v923 = vcombine.low %v911, %v912
        %v925 = vunpack.c.l.s4 1983009808
        %v926 = vunpack.c.0.s8 %v925
        %v927 = vlaneseq
        %v928 = vshrl.u32 %v927, 7
        %v929 = vsub.s32 %v926, %v928
        %v930 = vrot.slane %v923, %v929
        %v931 = vcombine.low %v903, %v910
        %v933 = vunpack.c.l.s4 1983009808
        %v934 = vunpack.c.0.s8 %v933
        %v935 = vlaneseq
        %v936 = vshrl.u32 %v935, 7
        %v937 = vsub.s32 %v934, %v936
        %v938 = vrot.slane %v931, %v937
        %v939 = vcombine.low %v913, %v914
        %v941 = vunpack.c.l.s4 1983009808
        %v942 = vunpack.c.0.s8 %v941
        %v943 = vlaneseq
        %v944 = vshrl.u32 %v943, 7
        %v945 = vsub.s32 %v942, %v944
        %v946 = vrot.slane %v939, %v945
        %v947 = vcombine.low %v922, %v930
        %v948 = vcombine.high %v922, %v930
        %v950 = vunpack.c.l.s4 1934713408
        %v951 = vunpack.c.0.s8 %v950
        %v952 = vlaneseq
        %v953 = vshrl.u32 %v952, 7
        %v954 = vsub.s32 %v951, %v953
        %v955 = vrot.slane %v947, %v954
        %v957 = vunpack.c.l.s4 1934713408
        %v958 = vunpack.c.0.s8 %v957
        %v959 = vlaneseq
        %v960 = vshrl.u32 %v959, 7
        %v961 = vsub.s32 %v958, %v960
        %v962 = vrot.slane %v948, %v961
        %v963 = vcombine.low %v938, %v946
        %v964 = vcombine.high %v938, %v946
        %v966 = vunpack.c.l.s4 1934713408
        %v967 = vunpack.c.0.s8 %v966
        %v968 = vlaneseq
        %v969 = vshrl.u32 %v968, 7
        %v970 = vsub.s32 %v967, %v969
        %v971 = vrot.slane %v963, %v970
        %v973 = vunpack.c.l.s4 1934713408
        %v974 = vunpack.c.0.s8 %v973
        %v975 = vlaneseq
        %v976 = vshrl.u32 %v975, 7
        %v977 = vsub.s32 %v974, %v976
        %v978 = vrot.slane %v964, %v977
        %v979 = vcombine.low %v955, %v971
        %v980 = vcombine.high %v955, %v971
        %v981 = vcombine.low %v962, %v978
        %v982 = vcombine.high %v962, %v978
        %984 = vrot.lane.b32.xlu0 %v750, 120
        %v985 = vpop.permute.xlu0 %984
        %987 = vrot.lane.b32.xlu0 %v750, 112
        %v988 = vpop.permute.xlu0 %987
        %990 = vrot.lane.b32.xlu0 %v750, 104
        %v991 = vpop.permute.xlu0 %990
        %v993 = vcombine.low %v750, %v988
        %v994 = vcombine.high %v750, %v988
        %v996 = vunpack.c.l.s4 1983009808
        %v997 = vunpack.c.0.s8 %v996
        %v998 = vlaneseq
        %v999 = vshrl.u32 %v998, 7
        %v1000 = vsub.s32 %v997, %v999
        %v1001 = vrot.slane %v993, %v1000
        %v1003 = vunpack.c.l.s4 1983009808
        %v1004 = vunpack.c.0.s8 %v1003
        %v1005 = vlaneseq
        %v1006 = vshrl.u32 %v1005, 7
        %v1007 = vsub.s32 %v1004, %v1006
        %v1008 = vrot.slane %v994, %v1007
        %v1009 = vcombine.low %v985, %v991
        %v1010 = vcombine.high %v985, %v991
        %v1012 = vunpack.c.l.s4 1983009808
        %v1013 = vunpack.c.0.s8 %v1012
        %v1014 = vlaneseq
        %v1015 = vshrl.u32 %v1014, 7
        %v1016 = vsub.s32 %v1013, %v1015
        %v1017 = vrot.slane %v1009, %v1016
        %v1019 = vunpack.c.l.s4 1983009808
        %v1020 = vunpack.c.0.s8 %v1019
        %v1021 = vlaneseq
        %v1022 = vshrl.u32 %v1021, 7
        %v1023 = vsub.s32 %v1020, %v1022
        %v1024 = vrot.slane %v1010, %v1023
        %v1025 = vcombine.low %v1001, %v1017
        %v1026 = vcombine.high %v1001, %v1017
        %v1028 = vunpack.c.l.s4 1934713408
        %v1029 = vunpack.c.0.s8 %v1028
        %v1030 = vlaneseq
        %v1031 = vshrl.u32 %v1030, 7
        %v1032 = vsub.s32 %v1029, %v1031
        %v1033 = vrot.slane %v1025, %v1032
        %v1035 = vunpack.c.l.s4 1934713408
        %v1036 = vunpack.c.0.s8 %v1035
        %v1037 = vlaneseq
        %v1038 = vshrl.u32 %v1037, 7
        %v1039 = vsub.s32 %v1036, %v1038
        %v1040 = vrot.slane %v1026, %v1039
        %v1041 = vcombine.low %v1008, %v1024
        %v1042 = vcombine.high %v1008, %v1024
        %v1044 = vunpack.c.l.s4 1934713408
        %v1045 = vunpack.c.0.s8 %v1044
        %v1046 = vlaneseq
        %v1047 = vshrl.u32 %v1046, 7
        %v1048 = vsub.s32 %v1045, %v1047
        %v1049 = vrot.slane %v1041, %v1048
        %v1051 = vunpack.c.l.s4 1934713408
        %v1052 = vunpack.c.0.s8 %v1051
        %v1053 = vlaneseq
        %v1054 = vshrl.u32 %v1053, 7
        %v1055 = vsub.s32 %v1052, %v1054
        %v1056 = vrot.slane %v1042, %v1055
        %v1057 = vcombine.high %v1033, 0.0
        %v1058 = vcombine.high %v1040, 0.0
        %v1059 = vcombine.high %v1049, 0.0
        %v1060 = vcombine.high %v1056, 0.0
        %v1061 = vcombine.low %v1033, %v1040
        %v1063 = vunpack.c.l.s4 1983009808
        %v1064 = vunpack.c.0.s8 %v1063
        %v1065 = vlaneseq
        %v1066 = vshrl.u32 %v1065, 7
        %v1067 = vsub.s32 %v1064, %v1066
        %v1068 = vrot.slane %v1061, %v1067
        %v1069 = vcombine.low %v1057, %v1058
        %v1071 = vunpack.c.l.s4 1983009808
        %v1072 = vunpack.c.0.s8 %v1071
        %v1073 = vlaneseq
        %v1074 = vshrl.u32 %v1073, 7
        %v1075 = vsub.s32 %v1072, %v1074
        %v1076 = vrot.slane %v1069, %v1075
        %v1077 = vcombine.low %v1049, %v1056
        %v1079 = vunpack.c.l.s4 1983009808
        %v1080 = vunpack.c.0.s8 %v1079
        %v1081 = vlaneseq
        %v1082 = vshrl.u32 %v1081, 7
        %v1083 = vsub.s32 %v1080, %v1082
        %v1084 = vrot.slane %v1077, %v1083
        %v1085 = vcombine.low %v1059, %v1060
        %v1087 = vunpack.c.l.s4 1983009808
        %v1088 = vunpack.c.0.s8 %v1087
        %v1089 = vlaneseq
        %v1090 = vshrl.u32 %v1089, 7
        %v1091 = vsub.s32 %v1088, %v1090
        %v1092 = vrot.slane %v1085, %v1091
        %v1093 = vcombine.low %v1068, %v1076
        %v1094 = vcombine.high %v1068, %v1076
        %v1096 = vunpack.c.l.s4 1934713408
        %v1097 = vunpack.c.0.s8 %v1096
        %v1098 = vlaneseq
        %v1099 = vshrl.u32 %v1098, 7
        %v1100 = vsub.s32 %v1097, %v1099
        %v1101 = vrot.slane %v1093, %v1100
        %v1103 = vunpack.c.l.s4 1934713408
        %v1104 = vunpack.c.0.s8 %v1103
        %v1105 = vlaneseq
        %v1106 = vshrl.u32 %v1105, 7
        %v1107 = vsub.s32 %v1104, %v1106
        %v1108 = vrot.slane %v1094, %v1107
        %v1109 = vcombine.low %v1084, %v1092
        %v1110 = vcombine.high %v1084, %v1092
        %v1112 = vunpack.c.l.s4 1934713408
        %v1113 = vunpack.c.0.s8 %v1112
        %v1114 = vlaneseq
        %v1115 = vshrl.u32 %v1114, 7
        %v1116 = vsub.s32 %v1113, %v1115
        %v1117 = vrot.slane %v1109, %v1116
        %v1119 = vunpack.c.l.s4 1934713408
        %v1120 = vunpack.c.0.s8 %v1119
        %v1121 = vlaneseq
        %v1122 = vshrl.u32 %v1121, 7
        %v1123 = vsub.s32 %v1120, %v1122
        %v1124 = vrot.slane %v1110, %v1123
        %v1125 = vcombine.low %v1101, %v1117
        %v1126 = vcombine.high %v1101, %v1117
        %v1127 = vcombine.low %v1108, %v1124
        %v1128 = vcombine.high %v1108, %v1124
        %1130 = vrot.lane.b32.xlu0 %v834, 120
        %v1131 = vpop.permute.xlu0 %1130
        %1133 = vrot.lane.b32.xlu0 %v834, 112
        %v1134 = vpop.permute.xlu0 %1133
        %1136 = vrot.lane.b32.xlu0 %v834, 104
        %v1137 = vpop.permute.xlu0 %1136
        %v1139 = vcombine.low %v834, %v1134
        %v1140 = vcombine.high %v834, %v1134
        %v1142 = vunpack.c.l.s4 1983009808
        %v1143 = vunpack.c.0.s8 %v1142
        %v1144 = vlaneseq
        %v1145 = vshrl.u32 %v1144, 7
        %v1146 = vsub.s32 %v1143, %v1145
        %v1147 = vrot.slane %v1139, %v1146
        %v1149 = vunpack.c.l.s4 1983009808
        %v1150 = vunpack.c.0.s8 %v1149
        %v1151 = vlaneseq
        %v1152 = vshrl.u32 %v1151, 7
        %v1153 = vsub.s32 %v1150, %v1152
        %v1154 = vrot.slane %v1140, %v1153
        %v1155 = vcombine.low %v1131, %v1137
        %v1156 = vcombine.high %v1131, %v1137
        %v1158 = vunpack.c.l.s4 1983009808
        %v1159 = vunpack.c.0.s8 %v1158
        %v1160 = vlaneseq
        %v1161 = vshrl.u32 %v1160, 7
        %v1162 = vsub.s32 %v1159, %v1161
        %v1163 = vrot.slane %v1155, %v1162
        %v1165 = vunpack.c.l.s4 1983009808
        %v1166 = vunpack.c.0.s8 %v1165
        %v1167 = vlaneseq
        %v1168 = vshrl.u32 %v1167, 7
        %v1169 = vsub.s32 %v1166, %v1168
        %v1170 = vrot.slane %v1156, %v1169
        %v1171 = vcombine.low %v1147, %v1163
        %v1172 = vcombine.high %v1147, %v1163
        %v1174 = vunpack.c.l.s4 1934713408
        %v1175 = vunpack.c.0.s8 %v1174
        %v1176 = vlaneseq
        %v1177 = vshrl.u32 %v1176, 7
        %v1178 = vsub.s32 %v1175, %v1177
        %v1179 = vrot.slane %v1171, %v1178
        %v1181 = vunpack.c.l.s4 1934713408
        %v1182 = vunpack.c.0.s8 %v1181
        %v1183 = vlaneseq
        %v1184 = vshrl.u32 %v1183, 7
        %v1185 = vsub.s32 %v1182, %v1184
        %v1186 = vrot.slane %v1172, %v1185
        %v1187 = vcombine.low %v1154, %v1170
        %v1188 = vcombine.high %v1154, %v1170
        %v1190 = vunpack.c.l.s4 1934713408
        %v1191 = vunpack.c.0.s8 %v1190
        %v1192 = vlaneseq
        %v1193 = vshrl.u32 %v1192, 7
        %v1194 = vsub.s32 %v1191, %v1193
        %v1195 = vrot.slane %v1187, %v1194
        %v1197 = vunpack.c.l.s4 1934713408
        %v1198 = vunpack.c.0.s8 %v1197
        %v1199 = vlaneseq
        %v1200 = vshrl.u32 %v1199, 7
        %v1201 = vsub.s32 %v1198, %v1200
        %v1202 = vrot.slane %v1188, %v1201
        %v1203 = vcombine.high %v1179, 0.0
        %v1204 = vcombine.high %v1186, 0.0
        %v1205 = vcombine.high %v1195, 0.0
        %v1206 = vcombine.high %v1202, 0.0
        %v1207 = vcombine.low %v1179, %v1186
        %v1209 = vunpack.c.l.s4 1983009808
        %v1210 = vunpack.c.0.s8 %v1209
        %v1211 = vlaneseq
        %v1212 = vshrl.u32 %v1211, 7
        %v1213 = vsub.s32 %v1210, %v1212
        %v1214 = vrot.slane %v1207, %v1213
        %v1215 = vcombine.low %v1203, %v1204
        %v1217 = vunpack.c.l.s4 1983009808
        %v1218 = vunpack.c.0.s8 %v1217
        %v1219 = vlaneseq
        %v1220 = vshrl.u32 %v1219, 7
        %v1221 = vsub.s32 %v1218, %v1220
        %v1222 = vrot.slane %v1215, %v1221
        %v1223 = vcombine.low %v1195, %v1202
        %v1225 = vunpack.c.l.s4 1983009808
        %v1226 = vunpack.c.0.s8 %v1225
        %v1227 = vlaneseq
        %v1228 = vshrl.u32 %v1227, 7
        %v1229 = vsub.s32 %v1226, %v1228
        %v1230 = vrot.slane %v1223, %v1229
        %v1231 = vcombine.low %v1205, %v1206
        %v1233 = vunpack.c.l.s4 1983009808
        %v1234 = vunpack.c.0.s8 %v1233
        %v1235 = vlaneseq
        %v1236 = vshrl.u32 %v1235, 7
        %v1237 = vsub.s32 %v1234, %v1236
        %v1238 = vrot.slane %v1231, %v1237
        %v1239 = vcombine.low %v1214, %v1222
        %v1240 = vcombine.high %v1214, %v1222
        %v1242 = vunpack.c.l.s4 1934713408
        %v1243 = vunpack.c.0.s8 %v1242
        %v1244 = vlaneseq
        %v1245 = vshrl.u32 %v1244, 7
        %v1246 = vsub.s32 %v1243, %v1245
        %v1247 = vrot.slane %v1239, %v1246
        %v1249 = vunpack.c.l.s4 1934713408
        %v1250 = vunpack.c.0.s8 %v1249
        %v1251 = vlaneseq
        %v1252 = vshrl.u32 %v1251, 7
        %v1253 = vsub.s32 %v1250, %v1252
        %v1254 = vrot.slane %v1240, %v1253
        %v1255 = vcombine.low %v1230, %v1238
        %v1256 = vcombine.high %v1230, %v1238
        %v1258 = vunpack.c.l.s4 1934713408
        %v1259 = vunpack.c.0.s8 %v1258
        %v1260 = vlaneseq
        %v1261 = vshrl.u32 %v1260, 7
        %v1262 = vsub.s32 %v1259, %v1261
        %v1263 = vrot.slane %v1255, %v1262
        %v1265 = vunpack.c.l.s4 1934713408
        %v1266 = vunpack.c.0.s8 %v1265
        %v1267 = vlaneseq
        %v1268 = vshrl.u32 %v1267, 7
        %v1269 = vsub.s32 %v1266, %v1268
        %v1270 = vrot.slane %v1256, %v1269
        %v1271 = vcombine.low %v1247, %v1263
        %v1272 = vcombine.high %v1247, %v1263
        %v1273 = vcombine.low %v1254, %v1270
        %v1274 = vcombine.high %v1254, %v1270
        %v1275 = vld [vmem:[%s512] sm:$0xff]
        %vm1276 = vcmp.eq.f32.partialorder %v1275, 0.0
        %v1277 = vsel %vm1276, -1e+30, 0.0
        %vm1278 = vcmask 64512
        %v1280 = vsel %vm1278, %v979, 0
        %v1283 = vsel %vm1278, %v1125, 0
        %1285 = vmatprep.subr.mxu0 0.0
        %1286 = vmatpush1.xpose.msra.mxu0 %v1283
        %1287 = vmatprep.subr.mxu0 0.0
        %1288 = vmatpush1.xpose.msra.mxu0 0.0
        %1289 = vmatprep.subr.mxu0 0.0
        %1290 = vmatpush1.xpose.msra.mxu0 0.0
        %1291 = vmatprep.subr.mxu0 0.0
        %1292 = vmatpush1.xpose.msra.mxu0 0.0
        %1293 = vmatprep.subr.mxu0 0.0
        %1294 = vmatpush1.xpose.msra.mxu0 0.0
        %1295 = vmatprep.subr.mxu0 0.0
        %1296 = vmatpush1.xpose.msra.mxu0 0.0
        %1297 = vmatprep.subr.mxu0 0.0
        %1298 = vmatpush1.xpose.msra.mxu0 0.0
        %1299 = vmatprep.subr.mxu0 0.0
        %1300 = vmatpush1.xpose.msra.mxu0 0.0
        %1301 = vmatprep.subr.mxu0 0.0
        %1302 = vmatpush1.xpose.msra.mxu0 0.0
        %1303 = vmatprep.subr.mxu0 0.0
        %1304 = vmatpush1.xpose.msra.mxu0 0.0
        %1305 = vmatprep.subr.mxu0 0.0
        %1306 = vmatpush1.xpose.msra.mxu0 0.0
        %1307 = vmatprep.subr.mxu0 0.0
        %1308 = vmatpush1.xpose.msra.mxu0 0.0
        %1309 = vmatprep.subr.mxu0 0.0
        %1310 = vmatpush1.xpose.msra.mxu0 0.0
        %1311 = vmatprep.subr.mxu0 0.0
        %1312 = vmatpush1.xpose.msra.mxu0 0.0
        %1313 = vmatprep.subr.mxu0 0.0
        %1314 = vmatpush1.xpose.msra.mxu0 0.0
        %1315 = vmatprep.subr.mxu0 0.0
        %1316 = vmatpush1.xpose.msra.mxu0 0.0
        %1317 = vmatprep.subr.mxu0 0.0
        %1318 = vmatpush1.xpose.msra.mxu0 0.0
        %1319 = vmatprep.subr.mxu0 0.0
        %1320 = vmatpush1.xpose.msra.mxu0 0.0
        %1321 = vmatprep.subr.mxu0 0.0
        %1322 = vmatpush1.xpose.msra.mxu0 0.0
        %1323 = vmatprep.subr.mxu0 0.0
        %1324 = vmatpush1.xpose.msra.mxu0 0.0
        %1325 = vmatprep.subr.mxu0 0.0
        %1326 = vmatpush1.xpose.msra.mxu0 0.0
        %1327 = vmatprep.subr.mxu0 0.0
        %1328 = vmatpush1.xpose.msra.mxu0 0.0
        %1329 = vmatprep.subr.mxu0 0.0
        %1330 = vmatpush1.xpose.msra.mxu0 0.0
        %1331 = vmatprep.subr.mxu0 0.0
        %1332 = vmatpush1.xpose.msra.mxu0 0.0
        %1333 = vmatprep.subr.mxu0 0.0
        %1334 = vmatpush1.xpose.msra.mxu0 0.0
        %1335 = vmatprep.subr.mxu0 0.0
        %1336 = vmatpush1.xpose.msra.mxu0 0.0
        %1337 = vmatprep.subr.mxu0 0.0
        %1338 = vmatpush1.xpose.msra.mxu0 0.0
        %1339 = vmatprep.subr.mxu0 0.0
        %1340 = vmatpush1.xpose.msra.mxu0 0.0
        %1341 = vmatprep.subr.mxu0 0.0
        %1342 = vmatpush1.xpose.msra.mxu0 0.0
        %1343 = vmatprep.subr.mxu0 0.0
        %1344 = vmatpush1.xpose.msra.mxu0 0.0
        %1345 = vmatprep.subr.mxu0 0.0
        %1346 = vmatpush1.xpose.msra.mxu0 0.0
        %1347 = vmatprep.subr.mxu0 0.0
        %1348 = vmatpush1.xpose.msra.mxu0 0.0
        %1349 = vmatprep.mubr.f32.mxu0 0.0
        %1350 = vmatmul.mubr.f32.gmra.mrb[0].mxu0 %v1280
        %v1351 = vpop.f32.mrb[0].mxu0
        %v1352 = vadd.f32 %v1277, %v1351
        %v1353 = vpop.f32.mrb[0].mxu0
        %1354 = vdwg.mxu0
        %v1356 = vsel %vm1278, %v980, 0
        %v1359 = vsel %vm1278, %v1126, 0
        %1361 = vmatprep.subr.mxu0 0.0
        %1362 = vmatpush1.xpose.msra.mxu0 %v1359
        %1363 = vmatprep.subr.mxu0 0.0
        %1364 = vmatpush1.xpose.msra.mxu0 0.0
        %1365 = vmatprep.subr.mxu0 0.0
        %1366 = vmatpush1.xpose.msra.mxu0 0.0
        %1367 = vmatprep.subr.mxu0 0.0
        %1368 = vmatpush1.xpose.msra.mxu0 0.0
        %1369 = vmatprep.subr.mxu0 0.0
        %1370 = vmatpush1.xpose.msra.mxu0 0.0
        %1371 = vmatprep.subr.mxu0 0.0
        %1372 = vmatpush1.xpose.msra.mxu0 0.0
        %1373 = vmatprep.subr.mxu0 0.0
        %1374 = vmatpush1.xpose.msra.mxu0 0.0
        %1375 = vmatprep.subr.mxu0 0.0
        %1376 = vmatpush1.xpose.msra.mxu0 0.0
        %1377 = vmatprep.subr.mxu0 0.0
        %1378 = vmatpush1.xpose.msra.mxu0 0.0
        %1379 = vmatprep.subr.mxu0 0.0
        %1380 = vmatpush1.xpose.msra.mxu0 0.0
        %1381 = vmatprep.subr.mxu0 0.0
        %1382 = vmatpush1.xpose.msra.mxu0 0.0
        %1383 = vmatprep.subr.mxu0 0.0
        %1384 = vmatpush1.xpose.msra.mxu0 0.0
        %1385 = vmatprep.subr.mxu0 0.0
        %1386 = vmatpush1.xpose.msra.mxu0 0.0
        %1387 = vmatprep.subr.mxu0 0.0
        %1388 = vmatpush1.xpose.msra.mxu0 0.0
        %1389 = vmatprep.subr.mxu0 0.0
        %1390 = vmatpush1.xpose.msra.mxu0 0.0
        %1391 = vmatprep.subr.mxu0 0.0
        %1392 = vmatpush1.xpose.msra.mxu0 0.0
        %1393 = vmatprep.subr.mxu0 0.0
        %1394 = vmatpush1.xpose.msra.mxu0 0.0
        %1395 = vmatprep.subr.mxu0 0.0
        %1396 = vmatpush1.xpose.msra.mxu0 0.0
        %1397 = vmatprep.subr.mxu0 0.0
        %1398 = vmatpush1.xpose.msra.mxu0 0.0
        %1399 = vmatprep.subr.mxu0 0.0
        %1400 = vmatpush1.xpose.msra.mxu0 0.0
        %1401 = vmatprep.subr.mxu0 0.0
        %1402 = vmatpush1.xpose.msra.mxu0 0.0
        %1403 = vmatprep.subr.mxu0 0.0
        %1404 = vmatpush1.xpose.msra.mxu0 0.0
        %1405 = vmatprep.subr.mxu0 0.0
        %1406 = vmatpush1.xpose.msra.mxu0 0.0
        %1407 = vmatprep.subr.mxu0 0.0
        %1408 = vmatpush1.xpose.msra.mxu0 0.0
        %1409 = vmatprep.subr.mxu0 0.0
        %1410 = vmatpush1.xpose.msra.mxu0 0.0
        %1411 = vmatprep.subr.mxu0 0.0
        %1412 = vmatpush1.xpose.msra.mxu0 0.0
        %1413 = vmatprep.subr.mxu0 0.0
        %1414 = vmatpush1.xpose.msra.mxu0 0.0
        %1415 = vmatprep.subr.mxu0 0.0
        %1416 = vmatpush1.xpose.msra.mxu0 0.0
        %1417 = vmatprep.subr.mxu0 0.0
        %1418 = vmatpush1.xpose.msra.mxu0 0.0
        %1419 = vmatprep.subr.mxu0 0.0
        %1420 = vmatpush1.xpose.msra.mxu0 0.0
        %1421 = vmatprep.subr.mxu0 0.0
        %1422 = vmatpush1.xpose.msra.mxu0 0.0
        %1423 = vmatprep.subr.mxu0 0.0
        %1424 = vmatpush1.xpose.msra.mxu0 0.0
        %1425 = vmatprep.mubr.f32.mxu0 0.0
        %1426 = vmatmul.mubr.f32.gmra.mrb[0].mxu0 %v1356
        %v1427 = vpop.f32.mrb[0].mxu0
        %v1428 = vadd.f32 %v1277, %v1427
        %v1429 = vpop.f32.mrb[0].mxu0
        %1430 = vdwg.mxu0
        %v1432 = vsel %vm1278, %v981, 0
        %v1435 = vsel %vm1278, %v1127, 0
        %1437 = vmatprep.subr.mxu0 0.0
        %1438 = vmatpush1.xpose.msra.mxu0 %v1435
        %1439 = vmatprep.subr.mxu0 0.0
        %1440 = vmatpush1.xpose.msra.mxu0 0.0
        %1441 = vmatprep.subr.mxu0 0.0
        %1442 = vmatpush1.xpose.msra.mxu0 0.0
        %1443 = vmatprep.subr.mxu0 0.0
        %1444 = vmatpush1.xpose.msra.mxu0 0.0
        %1445 = vmatprep.subr.mxu0 0.0
        %1446 = vmatpush1.xpose.msra.mxu0 0.0
        %1447 = vmatprep.subr.mxu0 0.0
        %1448 = vmatpush1.xpose.msra.mxu0 0.0
        %1449 = vmatprep.subr.mxu0 0.0
        %1450 = vmatpush1.xpose.msra.mxu0 0.0
        %1451 = vmatprep.subr.mxu0 0.0
        %1452 = vmatpush1.xpose.msra.mxu0 0.0
        %1453 = vmatprep.subr.mxu0 0.0
        %1454 = vmatpush1.xpose.msra.mxu0 0.0
        %1455 = vmatprep.subr.mxu0 0.0
        %1456 = vmatpush1.xpose.msra.mxu0 0.0
        %1457 = vmatprep.subr.mxu0 0.0
        %1458 = vmatpush1.xpose.msra.mxu0 0.0
        %1459 = vmatprep.subr.mxu0 0.0
        %1460 = vmatpush1.xpose.msra.mxu0 0.0
        %1461 = vmatprep.subr.mxu0 0.0
        %1462 = vmatpush1.xpose.msra.mxu0 0.0
        %1463 = vmatprep.subr.mxu0 0.0
        %1464 = vmatpush1.xpose.msra.mxu0 0.0
        %1465 = vmatprep.subr.mxu0 0.0
        %1466 = vmatpush1.xpose.msra.mxu0 0.0
        %1467 = vmatprep.subr.mxu0 0.0
        %1468 = vmatpush1.xpose.msra.mxu0 0.0
        %1469 = vmatprep.subr.mxu0 0.0
        %1470 = vmatpush1.xpose.msra.mxu0 0.0
        %1471 = vmatprep.subr.mxu0 0.0
        %1472 = vmatpush1.xpose.msra.mxu0 0.0
        %1473 = vmatprep.subr.mxu0 0.0
        %1474 = vmatpush1.xpose.msra.mxu0 0.0
        %1475 = vmatprep.subr.mxu0 0.0
        %1476 = vmatpush1.xpose.msra.mxu0 0.0
        %1477 = vmatprep.subr.mxu0 0.0
        %1478 = vmatpush1.xpose.msra.mxu0 0.0
        %1479 = vmatprep.subr.mxu0 0.0
        %1480 = vmatpush1.xpose.msra.mxu0 0.0
        %1481 = vmatprep.subr.mxu0 0.0
        %1482 = vmatpush1.xpose.msra.mxu0 0.0
        %1483 = vmatprep.subr.mxu0 0.0
        %1484 = vmatpush1.xpose.msra.mxu0 0.0
        %1485 = vmatprep.subr.mxu0 0.0
        %1486 = vmatpush1.xpose.msra.mxu0 0.0
        %1487 = vmatprep.subr.mxu0 0.0
        %1488 = vmatpush1.xpose.msra.mxu0 0.0
        %1489 = vmatprep.subr.mxu0 0.0
        %1490 = vmatpush1.xpose.msra.mxu0 0.0
        %1491 = vmatprep.subr.mxu0 0.0
        %1492 = vmatpush1.xpose.msra.mxu0 0.0
        %1493 = vmatprep.subr.mxu0 0.0
        %1494 = vmatpush1.xpose.msra.mxu0 0.0
        %1495 = vmatprep.subr.mxu0 0.0
        %1496 = vmatpush1.xpose.msra.mxu0 0.0
        %1497 = vmatprep.subr.mxu0 0.0
        %1498 = vmatpush1.xpose.msra.mxu0 0.0
        %1499 = vmatprep.subr.mxu0 0.0
        %1500 = vmatpush1.xpose.msra.mxu0 0.0
        %1501 = vmatprep.mubr.f32.mxu0 0.0
        %1502 = vmatmul.mubr.f32.gmra.mrb[0].mxu0 %v1432
        %v1503 = vpop.f32.mrb[0].mxu0
        %v1504 = vadd.f32 %v1277, %v1503
        %v1505 = vpop.f32.mrb[0].mxu0
        %1506 = vdwg.mxu0
        %v1508 = vsel %vm1278, %v982, 0
        %v1511 = vsel %vm1278, %v1128, 0
        %1513 = vmatprep.subr.mxu0 0.0
        %1514 = vmatpush1.xpose.msra.mxu0 %v1511
        %1515 = vmatprep.subr.mxu0 0.0
        %1516 = vmatpush1.xpose.msra.mxu0 0.0
        %1517 = vmatprep.subr.mxu0 0.0
        %1518 = vmatpush1.xpose.msra.mxu0 0.0
        %1519 = vmatprep.subr.mxu0 0.0
        %1520 = vmatpush1.xpose.msra.mxu0 0.0
        %1521 = vmatprep.subr.mxu0 0.0
        %1522 = vmatpush1.xpose.msra.mxu0 0.0
        %1523 = vmatprep.subr.mxu0 0.0
        %1524 = vmatpush1.xpose.msra.mxu0 0.0
        %1525 = vmatprep.subr.mxu0 0.0
        %1526 = vmatpush1.xpose.msra.mxu0 0.0
        %1527 = vmatprep.subr.mxu0 0.0
        %1528 = vmatpush1.xpose.msra.mxu0 0.0
        %1529 = vmatprep.subr.mxu0 0.0
        %1530 = vmatpush1.xpose.msra.mxu0 0.0
        %1531 = vmatprep.subr.mxu0 0.0
        %1532 = vmatpush1.xpose.msra.mxu0 0.0
        %1533 = vmatprep.subr.mxu0 0.0
        %1534 = vmatpush1.xpose.msra.mxu0 0.0
        %1535 = vmatprep.subr.mxu0 0.0
        %1536 = vmatpush1.xpose.msra.mxu0 0.0
        %1537 = vmatprep.subr.mxu0 0.0
        %1538 = vmatpush1.xpose.msra.mxu0 0.0
        %1539 = vmatprep.subr.mxu0 0.0
        %1540 = vmatpush1.xpose.msra.mxu0 0.0
        %1541 = vmatprep.subr.mxu0 0.0
        %1542 = vmatpush1.xpose.msra.mxu0 0.0
        %1543 = vmatprep.subr.mxu0 0.0
        %1544 = vmatpush1.xpose.msra.mxu0 0.0
        %1545 = vmatprep.subr.mxu0 0.0
        %1546 = vmatpush1.xpose.msra.mxu0 0.0
        %1547 = vmatprep.subr.mxu0 0.0
        %1548 = vmatpush1.xpose.msra.mxu0 0.0
        %1549 = vmatprep.subr.mxu0 0.0
        %1550 = vmatpush1.xpose.msra.mxu0 0.0
        %1551 = vmatprep.subr.mxu0 0.0
        %1552 = vmatpush1.xpose.msra.mxu0 0.0
        %1553 = vmatprep.subr.mxu0 0.0
        %1554 = vmatpush1.xpose.msra.mxu0 0.0
        %1555 = vmatprep.subr.mxu0 0.0
        %1556 = vmatpush1.xpose.msra.mxu0 0.0
        %1557 = vmatprep.subr.mxu0 0.0
        %1558 = vmatpush1.xpose.msra.mxu0 0.0
        %1559 = vmatprep.subr.mxu0 0.0
        %1560 = vmatpush1.xpose.msra.mxu0 0.0
        %1561 = vmatprep.subr.mxu0 0.0
        %1562 = vmatpush1.xpose.msra.mxu0 0.0
        %1563 = vmatprep.subr.mxu0 0.0
        %1564 = vmatpush1.xpose.msra.mxu0 0.0
        %1565 = vmatprep.subr.mxu0 0.0
        %1566 = vmatpush1.xpose.msra.mxu0 0.0
        %1567 = vmatprep.subr.mxu0 0.0
        %1568 = vmatpush1.xpose.msra.mxu0 0.0
        %1569 = vmatprep.subr.mxu0 0.0
        %1570 = vmatpush1.xpose.msra.mxu0 0.0
        %1571 = vmatprep.subr.mxu0 0.0
        %1572 = vmatpush1.xpose.msra.mxu0 0.0
        %1573 = vmatprep.subr.mxu0 0.0
        %1574 = vmatpush1.xpose.msra.mxu0 0.0
        %1575 = vmatprep.subr.mxu0 0.0
        %1576 = vmatpush1.xpose.msra.mxu0 0.0
        %1577 = vmatprep.mubr.f32.mxu0 0.0
        %1578 = vmatmul.mubr.f32.gmra.mrb[0].mxu0 %v1508
        %v1579 = vpop.f32.mrb[0].mxu0
        %v1580 = vadd.f32 %v1277, %v1579
        %v1581 = vpop.f32.mrb[0].mxu0
        %1582 = vdwg.mxu0
        %v1583 = vsel %vm1278, %v1352, -inf
        %1584 = vmax.xlane.f32.xlu0 %v1583
        %v1585 = vpop.xlane.xlu0 %1584
        %v1586 = vsel %vm1278, %v1428, -inf
        %1587 = vmax.xlane.f32.xlu0 %v1586
        %v1588 = vpop.xlane.xlu0 %1587
        %v1589 = vsel %vm1278, %v1504, -inf
        %1590 = vmax.xlane.f32.xlu0 %v1589
        %v1591 = vpop.xlane.xlu0 %1590
        %v1592 = vsel %vm1278, %v1580, -inf
        %1593 = vmax.xlane.f32.xlu0 %v1592
        %v1594 = vpop.xlane.xlu0 %1593
        %v1595 = vsub.f32 %v1352, %v1585
        %v1596 = vsub.f32 %v1428, %v1588
        %v1597 = vsub.f32 %v1504, %v1591
        %v1598 = vsub.f32 %v1580, %v1594
        %v1599 = vmul.f32 %v1595, 1.442695
        %v1600 = vpow.pop %v1599
        %v1601 = vmul.f32 %v1596, 1.442695
        %v1602 = vpow.pop %v1601
        %v1603 = vmul.f32 %v1597, 1.442695
        %v1604 = vpow.pop %v1603
        %v1605 = vmul.f32 %v1598, 1.442695
        %v1606 = vpow.pop %v1605
        %v1607 = vsel %vm1278, %v1600, 0.0
        %1608 = vadd.xlane.f32.xlu0 %v1607
        %v1609 = vpop.xlane.xlu0 %1608
        %v1610 = vsel %vm1278, %v1602, 0.0
        %1611 = vadd.xlane.f32.xlu0 %v1610
        %v1612 = vpop.xlane.xlu0 %1611
        %v1613 = vsel %vm1278, %v1604, 0.0
        %1614 = vadd.xlane.f32.xlu0 %v1613
        %v1615 = vpop.xlane.xlu0 %1614
        %v1616 = vsel %vm1278, %v1606, 0.0
        %1617 = vadd.xlane.f32.xlu0 %v1616
        %v1618 = vpop.xlane.xlu0 %1617
        %v1619 = vrcp.pop %v1609
        %v1620 = vrcp.pop %v1612
        %v1621 = vrcp.pop %v1615
        %v1622 = vrcp.pop %v1618
        %v1623 = vmul.f32 %v1600, %v1619
        %v1624 = vmul.f32 %v1602, %v1620
        %v1625 = vmul.f32 %v1604, %v1621
        %v1626 = vmul.f32 %v1606, %v1622
        %v1628 = vsel %vm1278, %v1623, 0
        %1630 = vmatprep.subr.mxu0 0.0
        %1631 = vmatpush1.msra.mxu0 %v1271
        %1632 = vmatprep.subr.mxu0 0.0
        %1633 = vmatpush1.msra.mxu0 0.0
        %1634 = vmatprep.subr.mxu0 0.0
        %1635 = vmatpush1.msra.mxu0 0.0
        %1636 = vmatprep.subr.mxu0 0.0
        %1637 = vmatpush1.msra.mxu0 0.0
        %1638 = vmatprep.subr.mxu0 0.0
        %1639 = vmatpush1.msra.mxu0 0.0
        %1640 = vmatprep.subr.mxu0 0.0
        %1641 = vmatpush1.msra.mxu0 0.0
        %1642 = vmatprep.subr.mxu0 0.0
        %1643 = vmatpush1.msra.mxu0 0.0
        %1644 = vmatprep.subr.mxu0 0.0
        %1645 = vmatpush1.msra.mxu0 0.0
        %1646 = vmatprep.subr.mxu0 0.0
        %1647 = vmatpush1.msra.mxu0 0.0
        %1648 = vmatprep.subr.mxu0 0.0
        %1649 = vmatpush1.msra.mxu0 0.0
        %1650 = vmatprep.subr.mxu0 0.0
        %1651 = vmatpush1.msra.mxu0 0.0
        %1652 = vmatprep.subr.mxu0 0.0
        %1653 = vmatpush1.msra.mxu0 0.0
        %1654 = vmatprep.subr.mxu0 0.0
        %1655 = vmatpush1.msra.mxu0 0.0
        %1656 = vmatprep.subr.mxu0 0.0
        %1657 = vmatpush1.msra.mxu0 0.0
        %1658 = vmatprep.subr.mxu0 0.0
        %1659 = vmatpush1.msra.mxu0 0.0
        %1660 = vmatprep.subr.mxu0 0.0
        %1661 = vmatpush1.msra.mxu0 0.0
        %1662 = vmatprep.subr.mxu0 0.0
        %1663 = vmatpush1.msra.mxu0 0.0
        %1664 = vmatprep.subr.mxu0 0.0
        %1665 = vmatpush1.msra.mxu0 0.0
        %1666 = vmatprep.subr.mxu0 0.0
        %1667 = vmatpush1.msra.mxu0 0.0
        %1668 = vmatprep.subr.mxu0 0.0
        %1669 = vmatpush1.msra.mxu0 0.0
        %1670 = vmatprep.subr.mxu0 0.0
        %1671 = vmatpush1.msra.mxu0 0.0
        %1672 = vmatprep.subr.mxu0 0.0
        %1673 = vmatpush1.msra.mxu0 0.0
        %1674 = vmatprep.subr.mxu0 0.0
        %1675 = vmatpush1.msra.mxu0 0.0
        %1676 = vmatprep.subr.mxu0 0.0
        %1677 = vmatpush1.msra.mxu0 0.0
        %1678 = vmatprep.subr.mxu0 0.0
        %1679 = vmatpush1.msra.mxu0 0.0
        %1680 = vmatprep.subr.mxu0 0.0
        %1681 = vmatpush1.msra.mxu0 0.0
        %1682 = vmatprep.subr.mxu0 0.0
        %1683 = vmatpush1.msra.mxu0 0.0
        %1684 = vmatprep.subr.mxu0 0.0
        %1685 = vmatpush1.msra.mxu0 0.0
        %1686 = vmatprep.subr.mxu0 0.0
        %1687 = vmatpush1.msra.mxu0 0.0
        %1688 = vmatprep.subr.mxu0 0.0
        %1689 = vmatpush1.msra.mxu0 0.0
        %1690 = vmatprep.subr.mxu0 0.0
        %1691 = vmatpush1.msra.mxu0 0.0
        %1692 = vmatprep.subr.mxu0 0.0
        %1693 = vmatpush1.msra.mxu0 0.0
        %1694 = vmatprep.mubr.f32.mxu0 0.0
        %1695 = vmatmul.mubr.f32.gmra.mrb[0].mxu0 %v1628
        %v1696 = vpop.f32.mrb[0].mxu0
        %v1697 = vadd.f32 0.0, %v1696
        %v1698 = vpop.f32.mrb[0].mxu0
        %1699 = vdwg.mxu0
        %v1701 = vsel %vm1278, %v1624, 0
        %1703 = vmatprep.subr.mxu0 0.0
        %1704 = vmatpush1.msra.mxu0 %v1272
        %1705 = vmatprep.subr.mxu0 0.0
        %1706 = vmatpush1.msra.mxu0 0.0
        %1707 = vmatprep.subr.mxu0 0.0
        %1708 = vmatpush1.msra.mxu0 0.0
        %1709 = vmatprep.subr.mxu0 0.0
        %1710 = vmatpush1.msra.mxu0 0.0
        %1711 = vmatprep.subr.mxu0 0.0
        %1712 = vmatpush1.msra.mxu0 0.0
        %1713 = vmatprep.subr.mxu0 0.0
        %1714 = vmatpush1.msra.mxu0 0.0
        %1715 = vmatprep.subr.mxu0 0.0
        %1716 = vmatpush1.msra.mxu0 0.0
        %1717 = vmatprep.subr.mxu0 0.0
        %1718 = vmatpush1.msra.mxu0 0.0
        %1719 = vmatprep.subr.mxu0 0.0
        %1720 = vmatpush1.msra.mxu0 0.0
        %1721 = vmatprep.subr.mxu0 0.0
        %1722 = vmatpush1.msra.mxu0 0.0
        %1723 = vmatprep.subr.mxu0 0.0
        %1724 = vmatpush1.msra.mxu0 0.0
        %1725 = vmatprep.subr.mxu0 0.0
        %1726 = vmatpush1.msra.mxu0 0.0
        %1727 = vmatprep.subr.mxu0 0.0
        %1728 = vmatpush1.msra.mxu0 0.0
        %1729 = vmatprep.subr.mxu0 0.0
        %1730 = vmatpush1.msra.mxu0 0.0
        %1731 = vmatprep.subr.mxu0 0.0
        %1732 = vmatpush1.msra.mxu0 0.0
        %1733 = vmatprep.subr.mxu0 0.0
        %1734 = vmatpush1.msra.mxu0 0.0
        %1735 = vmatprep.subr.mxu0 0.0
        %1736 = vmatpush1.msra.mxu0 0.0
        %1737 = vmatprep.subr.mxu0 0.0
        %1738 = vmatpush1.msra.mxu0 0.0
        %1739 = vmatprep.subr.mxu0 0.0
        %1740 = vmatpush1.msra.mxu0 0.0
        %1741 = vmatprep.subr.mxu0 0.0
        %1742 = vmatpush1.msra.mxu0 0.0
        %1743 = vmatprep.subr.mxu0 0.0
        %1744 = vmatpush1.msra.mxu0 0.0
        %1745 = vmatprep.subr.mxu0 0.0
        %1746 = vmatpush1.msra.mxu0 0.0
        %1747 = vmatprep.subr.mxu0 0.0
        %1748 = vmatpush1.msra.mxu0 0.0
        %1749 = vmatprep.subr.mxu0 0.0
        %1750 = vmatpush1.msra.mxu0 0.0
        %1751 = vmatprep.subr.mxu0 0.0
        %1752 = vmatpush1.msra.mxu0 0.0
        %1753 = vmatprep.subr.mxu0 0.0
        %1754 = vmatpush1.msra.mxu0 0.0
        %1755 = vmatprep.subr.mxu0 0.0
        %1756 = vmatpush1.msra.mxu0 0.0
        %1757 = vmatprep.subr.mxu0 0.0
        %1758 = vmatpush1.msra.mxu0 0.0
        %1759 = vmatprep.subr.mxu0 0.0
        %1760 = vmatpush1.msra.mxu0 0.0
        %1761 = vmatprep.subr.mxu0 0.0
        %1762 = vmatpush1.msra.mxu0 0.0
        %1763 = vmatprep.subr.mxu0 0.0
        %1764 = vmatpush1.msra.mxu0 0.0
        %1765 = vmatprep.subr.mxu0 0.0
        %1766 = vmatpush1.msra.mxu0 0.0
        %1767 = vmatprep.mubr.f32.mxu0 0.0
        %1768 = vmatmul.mubr.f32.gmra.mrb[0].mxu0 %v1701
        %v1769 = vpop.f32.mrb[0].mxu0
        %v1770 = vadd.f32 0.0, %v1769
        %v1771 = vpop.f32.mrb[0].mxu0
        %1772 = vdwg.mxu0
        %v1774 = vsel %vm1278, %v1625, 0
        %1776 = vmatprep.subr.mxu0 0.0
        %1777 = vmatpush1.msra.mxu0 %v1273
        %1778 = vmatprep.subr.mxu0 0.0
        %1779 = vmatpush1.msra.mxu0 0.0
        %1780 = vmatprep.subr.mxu0 0.0
        %1781 = vmatpush1.msra.mxu0 0.0
        %1782 = vmatprep.subr.mxu0 0.0
        %1783 = vmatpush1.msra.mxu0 0.0
        %1784 = vmatprep.subr.mxu0 0.0
        %1785 = vmatpush1.msra.mxu0 0.0
        %1786 = vmatprep.subr.mxu0 0.0
        %1787 = vmatpush1.msra.mxu0 0.0
        %1788 = vmatprep.subr.mxu0 0.0
        %1789 = vmatpush1.msra.mxu0 0.0
        %1790 = vmatprep.subr.mxu0 0.0
        %1791 = vmatpush1.msra.mxu0 0.0
        %1792 = vmatprep.subr.mxu0 0.0
        %1793 = vmatpush1.msra.mxu0 0.0
        %1794 = vmatprep.subr.mxu0 0.0
        %1795 = vmatpush1.msra.mxu0 0.0
        %1796 = vmatprep.subr.mxu0 0.0
        %1797 = vmatpush1.msra.mxu0 0.0
        %1798 = vmatprep.subr.mxu0 0.0
        %1799 = vmatpush1.msra.mxu0 0.0
        %1800 = vmatprep.subr.mxu0 0.0
        %1801 = vmatpush1.msra.mxu0 0.0
        %1802 = vmatprep.subr.mxu0 0.0
        %1803 = vmatpush1.msra.mxu0 0.0
        %1804 = vmatprep.subr.mxu0 0.0
        %1805 = vmatpush1.msra.mxu0 0.0
        %1806 = vmatprep.subr.mxu0 0.0
        %1807 = vmatpush1.msra.mxu0 0.0
        %1808 = vmatprep.subr.mxu0 0.0
        %1809 = vmatpush1.msra.mxu0 0.0
        %1810 = vmatprep.subr.mxu0 0.0
        %1811 = vmatpush1.msra.mxu0 0.0
        %1812 = vmatprep.subr.mxu0 0.0
        %1813 = vmatpush1.msra.mxu0 0.0
        %1814 = vmatprep.subr.mxu0 0.0
        %1815 = vmatpush1.msra.mxu0 0.0
        %1816 = vmatprep.subr.mxu0 0.0
        %1817 = vmatpush1.msra.mxu0 0.0
        %1818 = vmatprep.subr.mxu0 0.0
        %1819 = vmatpush1.msra.mxu0 0.0
        %1820 = vmatprep.subr.mxu0 0.0
        %1821 = vmatpush1.msra.mxu0 0.0
        %1822 = vmatprep.subr.mxu0 0.0
        %1823 = vmatpush1.msra.mxu0 0.0
        %1824 = vmatprep.subr.mxu0 0.0
        %1825 = vmatpush1.msra.mxu0 0.0
        %1826 = vmatprep.subr.mxu0 0.0
        %1827 = vmatpush1.msra.mxu0 0.0
        %1828 = vmatprep.subr.mxu0 0.0
        %1829 = vmatpush1.msra.mxu0 0.0
        %1830 = vmatprep.subr.mxu0 0.0
        %1831 = vmatpush1.msra.mxu0 0.0
        %1832 = vmatprep.subr.mxu0 0.0
        %1833 = vmatpush1.msra.mxu0 0.0
        %1834 = vmatprep.subr.mxu0 0.0
        %1835 = vmatpush1.msra.mxu0 0.0
        %1836 = vmatprep.subr.mxu0 0.0
        %1837 = vmatpush1.msra.mxu0 0.0
        %1838 = vmatprep.subr.mxu0 0.0
        %1839 = vmatpush1.msra.mxu0 0.0
        %1840 = vmatprep.mubr.f32.mxu0 0.0
        %1841 = vmatmul.mubr.f32.gmra.mrb[0].mxu0 %v1774
        %v1842 = vpop.f32.mrb[0].mxu0
        %v1843 = vadd.f32 0.0, %v1842
        %v1844 = vpop.f32.mrb[0].mxu0
        %1845 = vdwg.mxu0
        %v1847 = vsel %vm1278, %v1626, 0
        %1849 = vmatprep.subr.mxu0 0.0
        %1850 = vmatpush1.msra.mxu0 %v1274
        %1851 = vmatprep.subr.mxu0 0.0
        %1852 = vmatpush1.msra.mxu0 0.0
        %1853 = vmatprep.subr.mxu0 0.0
        %1854 = vmatpush1.msra.mxu0 0.0
        %1855 = vmatprep.subr.mxu0 0.0
        %1856 = vmatpush1.msra.mxu0 0.0
        %1857 = vmatprep.subr.mxu0 0.0
        %1858 = vmatpush1.msra.mxu0 0.0
        %1859 = vmatprep.subr.mxu0 0.0
        %1860 = vmatpush1.msra.mxu0 0.0
        %1861 = vmatprep.subr.mxu0 0.0
        %1862 = vmatpush1.msra.mxu0 0.0
        %1863 = vmatprep.subr.mxu0 0.0
        %1864 = vmatpush1.msra.mxu0 0.0
        %1865 = vmatprep.subr.mxu0 0.0
        %1866 = vmatpush1.msra.mxu0 0.0
        %1867 = vmatprep.subr.mxu0 0.0
        %1868 = vmatpush1.msra.mxu0 0.0
        %1869 = vmatprep.subr.mxu0 0.0
        %1870 = vmatpush1.msra.mxu0 0.0
        %1871 = vmatprep.subr.mxu0 0.0
        %1872 = vmatpush1.msra.mxu0 0.0
        %1873 = vmatprep.subr.mxu0 0.0
        %1874 = vmatpush1.msra.mxu0 0.0
        %1875 = vmatprep.subr.mxu0 0.0
        %1876 = vmatpush1.msra.mxu0 0.0
        %1877 = vmatprep.subr.mxu0 0.0
        %1878 = vmatpush1.msra.mxu0 0.0
        %1879 = vmatprep.subr.mxu0 0.0
        %1880 = vmatpush1.msra.mxu0 0.0
        %1881 = vmatprep.subr.mxu0 0.0
        %1882 = vmatpush1.msra.mxu0 0.0
        %1883 = vmatprep.subr.mxu0 0.0
        %1884 = vmatpush1.msra.mxu0 0.0
        %1885 = vmatprep.subr.mxu0 0.0
        %1886 = vmatpush1.msra.mxu0 0.0
        %1887 = vmatprep.subr.mxu0 0.0
        %1888 = vmatpush1.msra.mxu0 0.0
        %1889 = vmatprep.subr.mxu0 0.0
        %1890 = vmatpush1.msra.mxu0 0.0
        %1891 = vmatprep.subr.mxu0 0.0
        %1892 = vmatpush1.msra.mxu0 0.0
        %1893 = vmatprep.subr.mxu0 0.0
        %1894 = vmatpush1.msra.mxu0 0.0
        %1895 = vmatprep.subr.mxu0 0.0
        %1896 = vmatpush1.msra.mxu0 0.0
        %1897 = vmatprep.subr.mxu0 0.0
        %1898 = vmatpush1.msra.mxu0 0.0
        %1899 = vmatprep.subr.mxu0 0.0
        %1900 = vmatpush1.msra.mxu0 0.0
        %1901 = vmatprep.subr.mxu0 0.0
        %1902 = vmatpush1.msra.mxu0 0.0
        %1903 = vmatprep.subr.mxu0 0.0
        %1904 = vmatpush1.msra.mxu0 0.0
        %1905 = vmatprep.subr.mxu0 0.0
        %1906 = vmatpush1.msra.mxu0 0.0
        %1907 = vmatprep.subr.mxu0 0.0
        %1908 = vmatpush1.msra.mxu0 0.0
        %1909 = vmatprep.subr.mxu0 0.0
        %1910 = vmatpush1.msra.mxu0 0.0
        %1911 = vmatprep.subr.mxu0 0.0
        %1912 = vmatpush1.msra.mxu0 0.0
        %1913 = vmatprep.mubr.f32.mxu0 0.0
        %1914 = vmatmul.mubr.f32.gmra.mrb[0].mxu0 %v1847
        %v1915 = vpop.f32.mrb[0].mxu0
        %v1916 = vadd.f32 0.0, %v1915
        %v1917 = vpop.f32.mrb[0].mxu0
        %1918 = vdwg.mxu0
        %v1919 = vld [vmem:[%s10] sm:$0xff]
        %v1920 = vld [vmem:[%s10 + $0x8] sm:$0xff]
        %v1921 = vld [vmem:[%s10 + $0x10] sm:$0xff]
        %v1922 = vld [vmem:[%s10 + $0x18] sm:$0xff]
        %v1924 = vsel %vm1278, %v1697, 0
        %1926 = vmatprep.subr.mxu0 0.0
        %1927 = vmatpush1.msra.mxu0 %v1919
        %1928 = vmatprep.subr.mxu0 0.0
        %1929 = vmatpush1.msra.mxu0 0.0
        %1930 = vmatprep.subr.mxu0 0.0
        %1931 = vmatpush1.msra.mxu0 0.0
        %1932 = vmatprep.subr.mxu0 0.0
        %1933 = vmatpush1.msra.mxu0 0.0
        %1934 = vmatprep.subr.mxu0 0.0
        %1935 = vmatpush1.msra.mxu0 0.0
        %1936 = vmatprep.subr.mxu0 0.0
        %1937 = vmatpush1.msra.mxu0 0.0
        %1938 = vmatprep.subr.mxu0 0.0
        %1939 = vmatpush1.msra.mxu0 0.0
        %1940 = vmatprep.subr.mxu0 0.0
        %1941 = vmatpush1.msra.mxu0 0.0
        %1942 = vmatprep.subr.mxu0 0.0
        %1943 = vmatpush1.msra.mxu0 0.0
        %1944 = vmatprep.subr.mxu0 0.0
        %1945 = vmatpush1.msra.mxu0 0.0
        %1946 = vmatprep.subr.mxu0 0.0
        %1947 = vmatpush1.msra.mxu0 0.0
        %1948 = vmatprep.subr.mxu0 0.0
        %1949 = vmatpush1.msra.mxu0 0.0
        %1950 = vmatprep.subr.mxu0 0.0
        %1951 = vmatpush1.msra.mxu0 0.0
        %1952 = vmatprep.subr.mxu0 0.0
        %1953 = vmatpush1.msra.mxu0 0.0
        %1954 = vmatprep.subr.mxu0 0.0
        %1955 = vmatpush1.msra.mxu0 0.0
        %1956 = vmatprep.subr.mxu0 0.0
        %1957 = vmatpush1.msra.mxu0 0.0
        %1958 = vmatprep.subr.mxu0 0.0
        %1959 = vmatpush1.msra.mxu0 0.0
        %1960 = vmatprep.subr.mxu0 0.0
        %1961 = vmatpush1.msra.mxu0 0.0
        %1962 = vmatprep.subr.mxu0 0.0
        %1963 = vmatpush1.msra.mxu0 0.0
        %1964 = vmatprep.subr.mxu0 0.0
        %1965 = vmatpush1.msra.mxu0 0.0
        %1966 = vmatprep.subr.mxu0 0.0
        %1967 = vmatpush1.msra.mxu0 0.0
        %1968 = vmatprep.subr.mxu0 0.0
        %1969 = vmatpush1.msra.mxu0 0.0
        %1970 = vmatprep.subr.mxu0 0.0
        %1971 = vmatpush1.msra.mxu0 0.0
        %1972 = vmatprep.subr.mxu0 0.0
        %1973 = vmatpush1.msra.mxu0 0.0
        %1974 = vmatprep.subr.mxu0 0.0
        %1975 = vmatpush1.msra.mxu0 0.0
        %1976 = vmatprep.subr.mxu0 0.0
        %1977 = vmatpush1.msra.mxu0 0.0
        %1978 = vmatprep.subr.mxu0 0.0
        %1979 = vmatpush1.msra.mxu0 0.0
        %1980 = vmatprep.subr.mxu0 0.0
        %1981 = vmatpush1.msra.mxu0 0.0
        %1982 = vmatprep.subr.mxu0 0.0
        %1983 = vmatpush1.msra.mxu0 0.0
        %1984 = vmatprep.subr.mxu0 0.0
        %1985 = vmatpush1.msra.mxu0 0.0
        %1986 = vmatprep.subr.mxu0 0.0
        %1987 = vmatpush1.msra.mxu0 0.0
        %1988 = vmatprep.subr.mxu0 0.0
        %1989 = vmatpush1.msra.mxu0 0.0
        %1990 = vmatprep.mubr.f32.mxu0 0.0
        %1991 = vmatmul.mubr.f32.gmra.mrb[0].mxu0 %v1924
        %v1992 = vpop.f32.mrb[0].mxu0
        %v1993 = vadd.f32 0.0, %v1992
        %v1994 = vpop.f32.mrb[0].mxu0
        %1995 = vdwg.mxu0
        %v1997 = vsel %vm1278, %v1770, 0
        %1999 = vmatprep.subr.mxu0 0.0
        %2000 = vmatpush1.msra.mxu0 %v1920
        %2001 = vmatprep.subr.mxu0 0.0
        %2002 = vmatpush1.msra.mxu0 0.0
        %2003 = vmatprep.subr.mxu0 0.0
        %2004 = vmatpush1.msra.mxu0 0.0
        %2005 = vmatprep.subr.mxu0 0.0
        %2006 = vmatpush1.msra.mxu0 0.0
        %2007 = vmatprep.subr.mxu0 0.0
        %2008 = vmatpush1.msra.mxu0 0.0
        %2009 = vmatprep.subr.mxu0 0.0
        %2010 = vmatpush1.msra.mxu0 0.0
        %2011 = vmatprep.subr.mxu0 0.0
        %2012 = vmatpush1.msra.mxu0 0.0
        %2013 = vmatprep.subr.mxu0 0.0
        %2014 = vmatpush1.msra.mxu0 0.0
        %2015 = vmatprep.subr.mxu0 0.0
        %2016 = vmatpush1.msra.mxu0 0.0
        %2017 = vmatprep.subr.mxu0 0.0
        %2018 = vmatpush1.msra.mxu0 0.0
        %2019 = vmatprep.subr.mxu0 0.0
        %2020 = vmatpush1.msra.mxu0 0.0
        %2021 = vmatprep.subr.mxu0 0.0
        %2022 = vmatpush1.msra.mxu0 0.0
        %2023 = vmatprep.subr.mxu0 0.0
        %2024 = vmatpush1.msra.mxu0 0.0
        %2025 = vmatprep.subr.mxu0 0.0
        %2026 = vmatpush1.msra.mxu0 0.0
        %2027 = vmatprep.subr.mxu0 0.0
        %2028 = vmatpush1.msra.mxu0 0.0
        %2029 = vmatprep.subr.mxu0 0.0
        %2030 = vmatpush1.msra.mxu0 0.0
        %2031 = vmatprep.subr.mxu0 0.0
        %2032 = vmatpush1.msra.mxu0 0.0
        %2033 = vmatprep.subr.mxu0 0.0
        %2034 = vmatpush1.msra.mxu0 0.0
        %2035 = vmatprep.subr.mxu0 0.0
        %2036 = vmatpush1.msra.mxu0 0.0
        %2037 = vmatprep.subr.mxu0 0.0
        %2038 = vmatpush1.msra.mxu0 0.0
        %2039 = vmatprep.subr.mxu0 0.0
        %2040 = vmatpush1.msra.mxu0 0.0
        %2041 = vmatprep.subr.mxu0 0.0
        %2042 = vmatpush1.msra.mxu0 0.0
        %2043 = vmatprep.subr.mxu0 0.0
        %2044 = vmatpush1.msra.mxu0 0.0
        %2045 = vmatprep.subr.mxu0 0.0
        %2046 = vmatpush1.msra.mxu0 0.0
        %2047 = vmatprep.subr.mxu0 0.0
        %2048 = vmatpush1.msra.mxu0 0.0
        %2049 = vmatprep.subr.mxu0 0.0
        %2050 = vmatpush1.msra.mxu0 0.0
        %2051 = vmatprep.subr.mxu0 0.0
        %2052 = vmatpush1.msra.mxu0 0.0
        %2053 = vmatprep.subr.mxu0 0.0
        %2054 = vmatpush1.msra.mxu0 0.0
        %2055 = vmatprep.subr.mxu0 0.0
        %2056 = vmatpush1.msra.mxu0 0.0
        %2057 = vmatprep.subr.mxu0 0.0
        %2058 = vmatpush1.msra.mxu0 0.0
        %2059 = vmatprep.subr.mxu0 0.0
        %2060 = vmatpush1.msra.mxu0 0.0
        %2061 = vmatprep.subr.mxu0 0.0
        %2062 = vmatpush1.msra.mxu0 0.0
        %2063 = vmatprep.mubr.f32.mxu0 0.0
        %2064 = vmatmul.mubr.f32.gmra.mrb[0].mxu0 %v1997
        %v2065 = vpop.f32.mrb[0].mxu0
        %v2066 = vadd.f32 0.0, %v2065
        %v2067 = vpop.f32.mrb[0].mxu0
        %2068 = vdwg.mxu0
        %v2070 = vsel %vm1278, %v1843, 0
        %2072 = vmatprep.subr.mxu0 0.0
        %2073 = vmatpush1.msra.mxu0 %v1921
        %2074 = vmatprep.subr.mxu0 0.0
        %2075 = vmatpush1.msra.mxu0 0.0
        %2076 = vmatprep.subr.mxu0 0.0
        %2077 = vmatpush1.msra.mxu0 0.0
        %2078 = vmatprep.subr.mxu0 0.0
        %2079 = vmatpush1.msra.mxu0 0.0
        %2080 = vmatprep.subr.mxu0 0.0
        %2081 = vmatpush1.msra.mxu0 0.0
        %2082 = vmatprep.subr.mxu0 0.0
        %2083 = vmatpush1.msra.mxu0 0.0
        %2084 = vmatprep.subr.mxu0 0.0
        %2085 = vmatpush1.msra.mxu0 0.0
        %2086 = vmatprep.subr.mxu0 0.0
        %2087 = vmatpush1.msra.mxu0 0.0
        %2088 = vmatprep.subr.mxu0 0.0
        %2089 = vmatpush1.msra.mxu0 0.0
        %2090 = vmatprep.subr.mxu0 0.0
        %2091 = vmatpush1.msra.mxu0 0.0
        %2092 = vmatprep.subr.mxu0 0.0
        %2093 = vmatpush1.msra.mxu0 0.0
        %2094 = vmatprep.subr.mxu0 0.0
        %2095 = vmatpush1.msra.mxu0 0.0
        %2096 = vmatprep.subr.mxu0 0.0
        %2097 = vmatpush1.msra.mxu0 0.0
        %2098 = vmatprep.subr.mxu0 0.0
        %2099 = vmatpush1.msra.mxu0 0.0
        %2100 = vmatprep.subr.mxu0 0.0
        %2101 = vmatpush1.msra.mxu0 0.0
        %2102 = vmatprep.subr.mxu0 0.0
        %2103 = vmatpush1.msra.mxu0 0.0
        %2104 = vmatprep.subr.mxu0 0.0
        %2105 = vmatpush1.msra.mxu0 0.0
        %2106 = vmatprep.subr.mxu0 0.0
        %2107 = vmatpush1.msra.mxu0 0.0
        %2108 = vmatprep.subr.mxu0 0.0
        %2109 = vmatpush1.msra.mxu0 0.0
        %2110 = vmatprep.subr.mxu0 0.0
        %2111 = vmatpush1.msra.mxu0 0.0
        %2112 = vmatprep.subr.mxu0 0.0
        %2113 = vmatpush1.msra.mxu0 0.0
        %2114 = vmatprep.subr.mxu0 0.0
        %2115 = vmatpush1.msra.mxu0 0.0
        %2116 = vmatprep.subr.mxu0 0.0
        %2117 = vmatpush1.msra.mxu0 0.0
        %2118 = vmatprep.subr.mxu0 0.0
        %2119 = vmatpush1.msra.mxu0 0.0
        %2120 = vmatprep.subr.mxu0 0.0
        %2121 = vmatpush1.msra.mxu0 0.0
        %2122 = vmatprep.subr.mxu0 0.0
        %2123 = vmatpush1.msra.mxu0 0.0
        %2124 = vmatprep.subr.mxu0 0.0
        %2125 = vmatpush1.msra.mxu0 0.0
        %2126 = vmatprep.subr.mxu0 0.0
        %2127 = vmatpush1.msra.mxu0 0.0
        %2128 = vmatprep.subr.mxu0 0.0
        %2129 = vmatpush1.msra.mxu0 0.0
        %2130 = vmatprep.subr.mxu0 0.0
        %2131 = vmatpush1.msra.mxu0 0.0
        %2132 = vmatprep.subr.mxu0 0.0
        %2133 = vmatpush1.msra.mxu0 0.0
        %2134 = vmatprep.subr.mxu0 0.0
        %2135 = vmatpush1.msra.mxu0 0.0
        %2136 = vmatprep.mubr.f32.mxu0 0.0
        %2137 = vmatmul.mubr.f32.gmra.mrb[0].mxu0 %v2070
        %v2138 = vpop.f32.mrb[0].mxu0
        %v2139 = vadd.f32 0.0, %v2138
        %v2140 = vpop.f32.mrb[0].mxu0
        %2141 = vdwg.mxu0
        %v2143 = vsel %vm1278, %v1916, 0
        %2145 = vmatprep.subr.mxu0 0.0
        %2146 = vmatpush1.msra.mxu0 %v1922
        %2147 = vmatprep.subr.mxu0 0.0
        %2148 = vmatpush1.msra.mxu0 0.0
        %2149 = vmatprep.subr.mxu0 0.0
        %2150 = vmatpush1.msra.mxu0 0.0
        %2151 = vmatprep.subr.mxu0 0.0
        %2152 = vmatpush1.msra.mxu0 0.0
        %2153 = vmatprep.subr.mxu0 0.0
        %2154 = vmatpush1.msra.mxu0 0.0
        %2155 = vmatprep.subr.mxu0 0.0
        %2156 = vmatpush1.msra.mxu0 0.0
        %2157 = vmatprep.subr.mxu0 0.0
        %2158 = vmatpush1.msra.mxu0 0.0
        %2159 = vmatprep.subr.mxu0 0.0
        %2160 = vmatpush1.msra.mxu0 0.0
        %2161 = vmatprep.subr.mxu0 0.0
        %2162 = vmatpush1.msra.mxu0 0.0
        %2163 = vmatprep.subr.mxu0 0.0
        %2164 = vmatpush1.msra.mxu0 0.0
        %2165 = vmatprep.subr.mxu0 0.0
        %2166 = vmatpush1.msra.mxu0 0.0
        %2167 = vmatprep.subr.mxu0 0.0
        %2168 = vmatpush1.msra.mxu0 0.0
        %2169 = vmatprep.subr.mxu0 0.0
        %2170 = vmatpush1.msra.mxu0 0.0
        %2171 = vmatprep.subr.mxu0 0.0
        %2172 = vmatpush1.msra.mxu0 0.0
        %2173 = vmatprep.subr.mxu0 0.0
        %2174 = vmatpush1.msra.mxu0 0.0
        %2175 = vmatprep.subr.mxu0 0.0
        %2176 = vmatpush1.msra.mxu0 0.0
        %2177 = vmatprep.subr.mxu0 0.0
        %2178 = vmatpush1.msra.mxu0 0.0
        %2179 = vmatprep.subr.mxu0 0.0
        %2180 = vmatpush1.msra.mxu0 0.0
        %2181 = vmatprep.subr.mxu0 0.0
        %2182 = vmatpush1.msra.mxu0 0.0
        %2183 = vmatprep.subr.mxu0 0.0
        %2184 = vmatpush1.msra.mxu0 0.0
        %2185 = vmatprep.subr.mxu0 0.0
        %2186 = vmatpush1.msra.mxu0 0.0
        %2187 = vmatprep.subr.mxu0 0.0
        %2188 = vmatpush1.msra.mxu0 0.0
        %2189 = vmatprep.subr.mxu0 0.0
        %2190 = vmatpush1.msra.mxu0 0.0
        %2191 = vmatprep.subr.mxu0 0.0
        %2192 = vmatpush1.msra.mxu0 0.0
        %2193 = vmatprep.subr.mxu0 0.0
        %2194 = vmatpush1.msra.mxu0 0.0
        %2195 = vmatprep.subr.mxu0 0.0
        %2196 = vmatpush1.msra.mxu0 0.0
        %2197 = vmatprep.subr.mxu0 0.0
        %2198 = vmatpush1.msra.mxu0 0.0
        %2199 = vmatprep.subr.mxu0 0.0
        %2200 = vmatpush1.msra.mxu0 0.0
        %2201 = vmatprep.subr.mxu0 0.0
        %2202 = vmatpush1.msra.mxu0 0.0
        %2203 = vmatprep.subr.mxu0 0.0
        %2204 = vmatpush1.msra.mxu0 0.0
        %2205 = vmatprep.subr.mxu0 0.0
        %2206 = vmatpush1.msra.mxu0 0.0
        %2207 = vmatprep.subr.mxu0 0.0
        %2208 = vmatpush1.msra.mxu0 0.0
        %2209 = vmatprep.mubr.f32.mxu0 0.0
        %2210 = vmatmul.mubr.f32.gmra.mrb[0].mxu0 %v2143
        %v2211 = vpop.f32.mrb[0].mxu0
        %v2212 = vadd.f32 0.0, %v2211
        %v2213 = vpop.f32.mrb[0].mxu0
        %2214 = vdwg.mxu0
        %v2215 = vsel %vm594, %v1993, 0.0
        %v2216 = vsel %vm594, %v2066, 0.0
        %v2217 = vadd.f32 %v2215, %v2216
        %v2218 = vsel %vm594, %v2139, 0.0
        %v2219 = vadd.f32 %v2217, %v2218
        %v2220 = vsel %vm594, %v2212, 0.0
        %v2221 = vadd.f32 %v2219, %v2220
        %v2222 = vld [vmem:[%s11] sm:$0x1]
        %v2224 = vlaneseq
        %v2225 = vshrl.u32 %v2224, 7
        %v2226 = vsub.s32 0, %v2225
        %v2227 = vrot.slane %v2222, %v2226
        %v2229 = vadd.f32 %v2221, %v2227
        %2230 = vst.msk [vmem:[%s579] sm:$0xff] %vm594, %v2229
        %s2231 = sand.u32 %s316, 1
        %s2232 = scalar_lea.sflag [#allocation4], %s2231
        %s2233 = sand.u32 %s316, 1
        %s2234 = smul.addr %s2233, 8
        %s2235 = scalar_lea.vmem [#allocation14], %s2234
        // Predicated region
        $region97: #{tpu_custom_call.1} parent=67 // pred_check
          %p2236 = pneg %p326
        $region98: #{tpu_custom_call.1} parent=67 // pred_check_branch
          %2238 = sbr.rel (%p2236) target = $region100
        $region99: #{tpu_custom_call.1} parent=67 // pred_region
          %s2240 = ssub.s32 128, 128
          %2241 = vsyncadd %s2232, %s2240
          %s2242 = smul.addr %s36, 128
          %s2243 = scalar_lea.hbm %s12, %s2242
          %s2245 = sshll.u32 %s2235, 4
          %s2246 = int_to_ptr.vmem [resolvable:$true] %s2245
          %2248 = dma.vmem_to_hbm [thread:$0]  %s2246, 128, %s2243, %s2232
        $region100: #{tpu_custom_call.1} parent=67 // pred_fallthru
          _
      $region68: #{tpu_custom_call.1} parent=5 // pred_fallthru
        _
      %p2249 = scmp.le.s32.totalorder 2, %s31
      // Predicated region
      $region101: #{tpu_custom_call.1} parent=5 // pred_check
        %p2250 = pneg %p2249
      $region102: #{tpu_custom_call.1} parent=5 // pred_check_branch
        %2252 = sbr.rel (%p2250) target = $region104
      $region103: #{tpu_custom_call.1} parent=5 // pred_region
        %s2253 = ssub.s32 %s31, 2
        // Predicated region
        $region105: #{tpu_custom_call.1} parent=103 // pred_check
          %p2254 = pneg %p332
        $region106: #{tpu_custom_call.1} parent=103 // pred_check_branch
          %2256 = sbr.rel (%p2254) target = $region108
        $region107: #{tpu_custom_call.1} parent=103 // pred_region
          %s2257 = sand.u32 %s317, 1
          %s2258 = scalar_lea.sflag [#allocation4], %s2257
          %s2259 = sand.u32 %s317, 1
          %s2260 = smul.addr %s2259, 8
          %s2261 = scalar_lea.vmem [#allocation14], %s2260
          %2262 = dma.done %s2258, 128
        $region108: #{tpu_custom_call.1} parent=103 // pred_fallthru
          _
      $region104: #{tpu_custom_call.1} parent=5 // pred_fallthru
        _
    $region6: #{tpu_custom_call.1} parent=1 // loop_footer
      %s35 = sadd.s32 1, %s31
    $region7: #{tpu_custom_call.1} parent=1 // loop_footer_branch
      %30 = sbr.rel target = $region3
    $region8: #{tpu_custom_call.1} parent=1 // loop_exit
      _
    %2263 = vsyncpa [#allocation3], 1
    %s2264 = scalar_lea.sflag [#allocation3], 1
    %2265 = vsyncpa %s2264, 1
    %2266 = vsyncpa [#allocation6], 1
    %s2267 = scalar_lea.sflag [#allocation6], 1
    %2268 = vsyncpa %s2267, 1
    %2269 = vsyncpa [#allocation9], 1
    %s2270 = scalar_lea.sflag [#allocation9], 1
    %2271 = vsyncpa %s2270, 1
    %2272 = vsyncpa [#allocation12], 1
    %2273 = vsyncpa [#allocation4], 1
    %s2274 = scalar_lea.sflag [#allocation4], 1
    %2275 = vsyncpa %s2274, 1

</llo_original>
